<compile_context>
chip_gen: v6e
topology: v6e:2x2x1
jax: 0.10.0
libtpu: 0.0.40
codegen_flags: <defaults>
</compile_context>

<pallas_src>
import jax
import jax.numpy as jnp
import numpy as np
from jax.experimental import pallas as pl
from jax.experimental.pallas import tpu as pltpu

EPS = 1e-5


def _band_blocks(w_hwio, wi, wo):
    """Per-ky banded matmul blocks for a VALID 3x3 conv on row-flattened (W*C) lanes.

    Block[ky][x*ci + i, y*co + o] = w_hwio[ky, x - y, i, o] for 0 <= x - y <= 2, so
    y_flat[ho, :] = concat_ky(x_flat[ho + ky, :]) @ concat_ky(Block[ky]).
    """
    kh, kw, ci, co = w_hwio.shape
    blocks = []
    for ky in range(kh):
        a = jnp.zeros((wi, ci, wo, co), jnp.float32)
        for kx in range(kw):
            sel = jnp.eye(wi, wo, -kx, dtype=jnp.float32)  # sel[x, y] = 1 iff x == y + kx
            a = a + sel[:, None, :, None] * w_hwio[ky, kx][None, :, None, :]
        blocks.append(a.reshape(wi * ci, wo * co))
    return blocks


def wnet_down_conv_block(x_nchw, params):
    """Wrapper: NCHW in, (pooled_NCHW, feature_map_NCHW) out."""
    N, Cin, H, W = x_nchw.shape
    Cout = params["w1"].shape[0]
    Ho, Wo = H - 2, W - 2
    Hp, Wp = H // 2, W // 2
    f32 = jnp.float32

    # Batch-in-lanes layout: (H, N*W*C).  NCHW boundary transposes stay in the
    # wrapper because the module's external contract is PyTorch NCHW.
    x_flat = jnp.transpose(x_nchw.astype(f32), (2, 0, 3, 1)).reshape(H, N * W * Cin)

    w1 = jnp.transpose(params["w1"].astype(f32), (2, 3, 1, 0))   # (3,3,Cin,Cout)
    w2 = jnp.transpose(params["w2"].astype(f32), (2, 3, 1, 0))   # (3,3,Cout,Cout)

    eye_n = jnp.eye(N, dtype=f32)

    # Conv1 operand: (3*N*W*Cin, N*Wo*Cout), block-diagonal over batch in each ky slab.
    a1 = jnp.concatenate([jnp.kron(eye_n, blk) for blk in _band_blocks(w1, W, Wo)], axis=0)

    # W-direction ReplicationPad2d(1) as a column-copy matrix:
    #   padded[:, xp, c] = z[:, clip(xp-1, 0, Wo-1), c]
    src = np.clip(np.arange(W) - 1, 0, Wo - 1)
    sel_pad = np.zeros((Wo, W), np.float32)
    sel_pad[src, np.arange(W)] = 1.0
    pw = jnp.asarray(np.kron(sel_pad, np.eye(Cout, dtype=np.float32)))   # (Wo*Cout, W*Cout)

    # Conv2 operand with block-1's W-pad folded in: (3*N*Wo*Cout, N*Wo*Cout).
    a2 = jnp.concatenate([jnp.kron(eye_n, jnp.dot(pw, blk))
                          for blk in _band_blocks(w2, W, Wo)], axis=0)

    # Batched W-pad matrix for the final feature map: (N*Wo*Cout, N*W*Cout).
    pw_b = jnp.kron(eye_n, pw)

    # 2x2 max-pool column selectors (even / odd W positions inside each batch block).
    sel_e = np.zeros((W, Wp), np.float32)
    sel_o = np.zeros((W, Wp), np.float32)
    sel_e[2 * np.arange(Wp), np.arange(Wp)] = 1.0
    sel_o[2 * np.arange(Wp) + 1, np.arange(Wp)] = 1.0
    eye_c = np.eye(Cout, dtype=np.float32)
    s_e = jnp.asarray(np.kron(np.eye(N, dtype=np.float32), np.kron(sel_e, eye_c)))
    s_o = jnp.asarray(np.kron(np.eye(N, dtype=np.float32), np.kron(sel_o, eye_c)))

    # Channel-broadcast matrix: (s @ m_chan)[j] = sum of s over all lanes sharing j's channel.
    m_chan = jnp.asarray(np.tile(np.eye(Cout, dtype=np.float32), (N * Wo, N * Wo)))

    def flat(v):  # per-channel (Cout,) -> (1, N*Wo*Cout) tiled over batch / W positions
        return jnp.tile(v.astype(f32), N * Wo).reshape(1, N * Wo * Cout)

    inv_cnt = 1.0 / float(N * Ho * Wo)

    def kernel(x_ref, a1_ref, a2_ref, pw_ref, se_ref, so_ref, m_ref,
               b1_ref, g1_ref, bt1_ref, b2_ref, g2_ref, bt2_ref,
               pooled_ref, fm_ref):

        def conv(xp, a_ref, b):
            # Whole-batch 3x3 VALID conv = one MXU matmul on 3 row-shifted lane slabs.
            p = jnp.concatenate([xp[0:Ho, :], xp[1:Ho + 1, :], xp[2:Ho + 2, :]], axis=-1)
            return jnp.dot(p, a_ref[...], preferred_element_type=jnp.float32) + b

        def bn(y, g, bt):
            # Training-mode BatchNorm2d: per-channel batch stats over (N, Ho, Wo), biased var.
            s1 = jnp.sum(y, axis=0, keepdims=True)
            s2 = jnp.sum(y * y, axis=0, keepdims=True)
            ch = jnp.dot(jnp.concatenate([s1, s2], axis=0), m_ref[...],
                         preferred_element_type=jnp.float32)
            mean = ch[0:1, :] * inv_cnt
            var = ch[1:2, :] * inv_cnt - mean * mean
            return (y - mean) * (jax.lax.rsqrt(var + EPS) * g) + bt

        x = x_ref[...]                                                    # (H, N*W*Cin)

        # Block 1: conv -> relu -> bn ; W pad folded into a2, H pad = row concat.
        y = conv(x, a1_ref, b1_ref[...])                                  # (Ho, N*Wo*Cout)
        y = bn(jnp.maximum(y, 0.0), g1_ref[...], bt1_ref[...])
        y = jnp.concatenate([y[0:1, :], y, y[Ho - 1:Ho, :]], axis=0)      # (H, N*Wo*Cout)

        # Block 2: conv -> relu -> bn.
        z = conv(y, a2_ref, b2_ref[...])                                  # (Ho, N*Wo*Cout)
        z = bn(jnp.maximum(z, 0.0), g2_ref[...], bt2_ref[...])

        # Feature map: W replication pad via matmul, H pad via row concat; one store.
        zp = jnp.dot(z, pw_ref[...], preferred_element_type=jnp.float32)  # (Ho, N*W*Cout)
        fm = jnp.concatenate([zp[0:1, :], zp, zp[Ho - 1:Ho, :]], axis=0)  # (H, N*W*Cout)
        fm_ref[...] = fm

        # 2x2 max pool: adjacent-row max, then even/odd column-selection matmuls; one store.
        rows = [jnp.maximum(fm[2 * i:2 * i + 1, :], fm[2 * i + 1:2 * i + 2, :])
                for i in range(Hp)]
        rmax = jnp.concatenate(rows, axis=0)                              # (Hp, N*W*Cout)
        pooled_ref[...] = jnp.maximum(
            jnp.dot(rmax, se_ref[...], preferred_element_type=jnp.float32),
            jnp.dot(rmax, so_ref[...], preferred_element_type=jnp.float32))

    args = (x_flat, a1, a2, pw_b, s_e, s_o, m_chan,
            flat(params["b1"]), flat(params["g1"]), flat(params["bt1"]),
            flat(params["b2"]), flat(params["g2"]), flat(params["bt2"]))

    out_shape = (jax.ShapeDtypeStruct((Hp, N * Wp * Cout), f32),
                 jax.ShapeDtypeStruct((H, N * W * Cout), f32))

    vmem = pl.BlockSpec(memory_space=pltpu.MemorySpace.VMEM)
    pooled_flat, fm_flat = pl.pallas_call(
        kernel,
        out_shape=out_shape,
        in_specs=[vmem] * len(args),
        out_specs=(vmem, vmem),
    )(*args)

    # Batch-in-lanes layout -> NCHW (reshape is free; transpose is the boundary op).
    fm_nchw = jnp.transpose(fm_flat.reshape(H, N, W, Cout), (1, 3, 0, 2))
    pooled_nchw = jnp.transpose(pooled_flat.reshape(Hp, N, Wp, Cout), (1, 3, 0, 2))
    return pooled_nchw, fm_nchw


def reference_forward(x_nchw, params):
    """Pure-JAX reference of the PyTorch forward (training-mode BN)."""
    x = jnp.transpose(x_nchw, (0, 2, 3, 1)).astype(jnp.float32)

    def conv(x, w, b):
        wh = jnp.transpose(w, (2, 3, 1, 0)).astype(jnp.float32)
        y = jax.lax.conv_general_dilated(x, wh, (1, 1), "VALID",
                                         dimension_numbers=("NHWC", "HWIO", "NHWC"))
        return y + b.reshape(1, 1, 1, -1)

    def bn(y, g, b):
        mean = y.mean(axis=(0, 1, 2), keepdims=True)
        var = ((y - mean) ** 2).mean(axis=(0, 1, 2), keepdims=True)
        return (y - mean) * jax.lax.rsqrt(var + EPS) * g.reshape(1, 1, 1, -1) + b.reshape(1, 1, 1, -1)

    def pad(y):
        return jnp.pad(y, ((0, 0), (1, 1), (1, 1), (0, 0)), mode="edge")

    y = pad(bn(jax.nn.relu(conv(x, params["w1"], params["b1"])), params["g1"], params["bt1"]))
    y = pad(bn(jax.nn.relu(conv(y, params["w2"], params["b2"])), params["g2"], params["bt2"]))
    fm = y
    pooled = jax.lax.reduce_window(fm, -jnp.inf, jax.lax.max,
                                   (1, 2, 2, 1), (1, 2, 2, 1), "VALID")
    return jnp.transpose(pooled, (0, 3, 1, 2)), jnp.transpose(fm, (0, 3, 1, 2))


if __name__ == "__main__":
    # Small shapes consistent with the module: batch=2, in_features=4, out_features=8, 16x16 spatial.
    N, Cin, Cout, H, W = 2, 4, 8, 16, 16

    key = jax.random.PRNGKey(0)
    k1, k2, k3, k4, kx = jax.random.split(key, 5)
    params = {
        "w1": 0.2 * jax.random.normal(k1, (Cout, Cin, 3, 3), jnp.float32),
        "b1": 0.1 * jax.random.normal(k2, (Cout,), jnp.float32),
        "w2": 0.2 * jax.random.normal(k3, (Cout, Cout, 3, 3), jnp.float32),
        "b2": 0.1 * jax.random.normal(k4, (Cout,), jnp.float32),
        "g1": jnp.ones((Cout,), jnp.float32),    # BatchNorm default weight
        "bt1": jnp.zeros((Cout,), jnp.float32),  # BatchNorm default bias
        "g2": jnp.ones((Cout,), jnp.float32),
        "bt2": jnp.zeros((Cout,), jnp.float32),
    }
    x = jax.random.normal(kx, (N, Cin, H, W), jnp.float32)

    fwd = jax.jit(wnet_down_conv_block)
    pooled, fm = fwd(x, params)
    jax.block_until_ready((pooled, fm))

    pooled_ref, fm_ref = reference_forward(x, params)
    assert pooled.shape == (N, Cout, H // 2, W // 2) and fm.shape == (N, Cout, H, W)
    assert jnp.allclose(fm, fm_ref, atol=5e-4, rtol=5e-4), "feature_map mismatch"
    assert jnp.allclose(pooled, pooled_ref, atol=5e-4, rtol=5e-4), "pooled mismatch"

    print("KERNEL_OK")
</pallas_src>

<mosaic_0001>
module attributes {stable_mosaic.version = 11 : i64} {
  func.func @kernel(%arg0: memref<16x128xf32, #tpu.memory_space<vmem>>, %arg1: memref<384x224xf32, #tpu.memory_space<vmem>>, %arg2: memref<672x224xf32, #tpu.memory_space<vmem>>, %arg3: memref<224x256xf32, #tpu.memory_space<vmem>>, %arg4: memref<256x128xf32, #tpu.memory_space<vmem>>, %arg5: memref<256x128xf32, #tpu.memory_space<vmem>>, %arg6: memref<224x224xf32, #tpu.memory_space<vmem>>, %arg7: memref<1x224xf32, #tpu.memory_space<vmem>>, %arg8: memref<1x224xf32, #tpu.memory_space<vmem>>, %arg9: memref<1x224xf32, #tpu.memory_space<vmem>>, %arg10: memref<1x224xf32, #tpu.memory_space<vmem>>, %arg11: memref<1x224xf32, #tpu.memory_space<vmem>>, %arg12: memref<1x224xf32, #tpu.memory_space<vmem>>, %arg13: memref<8x128xf32, #tpu.memory_space<vmem>>, %arg14: memref<16x256xf32, #tpu.memory_space<vmem>>) attributes {dimension_semantics = [], scalar_prefetch = 0 : i64, scratch_operands = 0 : i64, tpu.core_type = #tpu.core_type<tc>} {
    %c0 = arith.constant 0 : index
    %c0_0 = arith.constant 0 : index
    %0 = vector.load %arg0[%c0, %c0_0] : memref<16x128xf32, #tpu.memory_space<vmem>>, vector<16x128xf32>
    %c0_1 = arith.constant 0 : index
    %c0_2 = arith.constant 0 : index
    %1 = vector.load %arg7[%c0_1, %c0_2] : memref<1x224xf32, #tpu.memory_space<vmem>>, vector<1x224xf32>
    %2 = vector.extract_strided_slice %0 {offsets = [0, 0], sizes = [14, 128], strides = [1, 1]} : vector<16x128xf32> to vector<14x128xf32>
    %3 = vector.extract_strided_slice %0 {offsets = [1, 0], sizes = [14, 128], strides = [1, 1]} : vector<16x128xf32> to vector<14x128xf32>
    %4 = vector.extract_strided_slice %0 {offsets = [2, 0], sizes = [14, 128], strides = [1, 1]} : vector<16x128xf32> to vector<14x128xf32>
    %5 = tpu.concatenate %2, %3, %4 in 1 : vector<14x128xf32>, vector<14x128xf32>, vector<14x128xf32> -> vector<14x384xf32>
    %c0_3 = arith.constant 0 : index
    %c0_4 = arith.constant 0 : index
    %6 = vector.load %arg1[%c0_3, %c0_4] : memref<384x224xf32, #tpu.memory_space<vmem>>, vector<384x224xf32>
    %cst = arith.constant dense<0.000000e+00> : vector<14x224xf32>
    %7 = tpu.matmul %5, %6, %cst {dimension_numbers = #tpu.dot_dimension_numbers<[1], [0], [0], [1], [0, 0, 1, 1], [], []>} : vector<14x384xf32>, vector<384x224xf32>, vector<14x224xf32> -> vector<14x224xf32>
    %8 = vector.broadcast %1 : vector<1x224xf32> to vector<14x224xf32>
    %9 = arith.addf %7, %8 : vector<14x224xf32>
    %cst_5 = arith.constant 0.000000e+00 : f32
    %10 = vector.broadcast %cst_5 : f32 to vector<14x224xf32>
    %11 = arith.maximumf %9, %10 : vector<14x224xf32>
    %c0_6 = arith.constant 0 : index
    %c0_7 = arith.constant 0 : index
    %12 = vector.load %arg8[%c0_6, %c0_7] : memref<1x224xf32, #tpu.memory_space<vmem>>, vector<1x224xf32>
    %c0_8 = arith.constant 0 : index
    %c0_9 = arith.constant 0 : index
    %13 = vector.load %arg9[%c0_8, %c0_9] : memref<1x224xf32, #tpu.memory_space<vmem>>, vector<1x224xf32>
    %cst_10 = arith.constant dense<0.000000e+00> : vector<224xf32>
    %14 = vector.multi_reduction <add>, %11, %cst_10 [0] : vector<14x224xf32> to vector<224xf32>
    %15 = vector.shape_cast %14 : vector<224xf32> to vector<1x224xf32>
    %16 = arith.mulf %11, %11 : vector<14x224xf32>
    %cst_11 = arith.constant dense<0.000000e+00> : vector<224xf32>
    %17 = vector.multi_reduction <add>, %16, %cst_11 [0] : vector<14x224xf32> to vector<224xf32>
    %18 = vector.shape_cast %17 : vector<224xf32> to vector<1x224xf32>
    %19 = tpu.concatenate %15, %18 in 0 : vector<1x224xf32>, vector<1x224xf32> -> vector<2x224xf32>
    %c0_12 = arith.constant 0 : index
    %c0_13 = arith.constant 0 : index
    %20 = vector.load %arg6[%c0_12, %c0_13] : memref<224x224xf32, #tpu.memory_space<vmem>>, vector<224x224xf32>
    %cst_14 = arith.constant dense<0.000000e+00> : vector<2x224xf32>
    %21 = tpu.matmul %19, %20, %cst_14 {dimension_numbers = #tpu.dot_dimension_numbers<[1], [0], [0], [1], [0, 0, 1, 1], [], []>} : vector<2x224xf32>, vector<224x224xf32>, vector<2x224xf32> -> vector<2x224xf32>
    %22 = vector.extract_strided_slice %21 {offsets = [0, 0], sizes = [1, 224], strides = [1, 1]} : vector<2x224xf32> to vector<1x224xf32>
    %cst_15 = arith.constant 0.00255102036 : f32
    %23 = vector.broadcast %cst_15 : f32 to vector<1x224xf32>
    %24 = arith.mulf %22, %23 : vector<1x224xf32>
    %25 = vector.extract_strided_slice %21 {offsets = [1, 0], sizes = [1, 224], strides = [1, 1]} : vector<2x224xf32> to vector<1x224xf32>
    %cst_16 = arith.constant 0.00255102036 : f32
    %26 = vector.broadcast %cst_16 : f32 to vector<1x224xf32>
    %27 = arith.mulf %25, %26 : vector<1x224xf32>
    %28 = arith.mulf %24, %24 : vector<1x224xf32>
    %29 = arith.subf %27, %28 : vector<1x224xf32>
    %30 = vector.broadcast %24 : vector<1x224xf32> to vector<14x224xf32>
    %31 = arith.subf %11, %30 : vector<14x224xf32>
    %cst_17 = arith.constant 9.99999974E-6 : f32
    %32 = vector.broadcast %cst_17 : f32 to vector<1x224xf32>
    %33 = arith.addf %29, %32 : vector<1x224xf32>
    %34 = math.rsqrt %33 : vector<1x224xf32>
    %35 = arith.mulf %34, %12 : vector<1x224xf32>
    %36 = vector.broadcast %35 : vector<1x224xf32> to vector<14x224xf32>
    %37 = arith.mulf %31, %36 : vector<14x224xf32>
    %38 = vector.broadcast %13 : vector<1x224xf32> to vector<14x224xf32>
    %39 = arith.addf %37, %38 : vector<14x224xf32>
    %40 = vector.extract_strided_slice %39 {offsets = [0, 0], sizes = [1, 224], strides = [1, 1]} : vector<14x224xf32> to vector<1x224xf32>
    %41 = vector.extract_strided_slice %39 {offsets = [13, 0], sizes = [1, 224], strides = [1, 1]} : vector<14x224xf32> to vector<1x224xf32>
    %42 = tpu.concatenate %40, %39, %41 in 0 : vector<1x224xf32>, vector<14x224xf32>, vector<1x224xf32> -> vector<16x224xf32>
    %c0_18 = arith.constant 0 : index
    %c0_19 = arith.constant 0 : index
    %43 = vector.load %arg10[%c0_18, %c0_19] : memref<1x224xf32, #tpu.memory_space<vmem>>, vector<1x224xf32>
    %44 = vector.extract_strided_slice %42 {offsets = [0, 0], sizes = [14, 224], strides = [1, 1]} : vector<16x224xf32> to vector<14x224xf32>
    %45 = vector.extract_strided_slice %42 {offsets = [1, 0], sizes = [14, 224], strides = [1, 1]} : vector<16x224xf32> to vector<14x224xf32>
    %46 = vector.extract_strided_slice %42 {offsets = [2, 0], sizes = [14, 224], strides = [1, 1]} : vector<16x224xf32> to vector<14x224xf32>
    %47 = tpu.concatenate %44, %45, %46 in 1 : vector<14x224xf32>, vector<14x224xf32>, vector<14x224xf32> -> vector<14x672xf32>
    %c0_20 = arith.constant 0 : index
    %c0_21 = arith.constant 0 : index
    %48 = vector.load %arg2[%c0_20, %c0_21] : memref<672x224xf32, #tpu.memory_space<vmem>>, vector<672x224xf32>
    %cst_22 = arith.constant dense<0.000000e+00> : vector<14x224xf32>
    %49 = tpu.matmul %47, %48, %cst_22 {dimension_numbers = #tpu.dot_dimension_numbers<[1], [0], [0], [1], [0, 0, 1, 1], [], []>} : vector<14x672xf32>, vector<672x224xf32>, vector<14x224xf32> -> vector<14x224xf32>
    %50 = vector.broadcast %43 : vector<1x224xf32> to vector<14x224xf32>
    %51 = arith.addf %49, %50 : vector<14x224xf32>
    %cst_23 = arith.constant 0.000000e+00 : f32
    %52 = vector.broadcast %cst_23 : f32 to vector<14x224xf32>
    %53 = arith.maximumf %51, %52 : vector<14x224xf32>
    %c0_24 = arith.constant 0 : index
    %c0_25 = arith.constant 0 : index
    %54 = vector.load %arg11[%c0_24, %c0_25] : memref<1x224xf32, #tpu.memory_space<vmem>>, vector<1x224xf32>
    %c0_26 = arith.constant 0 : index
    %c0_27 = arith.constant 0 : index
    %55 = vector.load %arg12[%c0_26, %c0_27] : memref<1x224xf32, #tpu.memory_space<vmem>>, vector<1x224xf32>
    %cst_28 = arith.constant dense<0.000000e+00> : vector<224xf32>
    %56 = vector.multi_reduction <add>, %53, %cst_28 [0] : vector<14x224xf32> to vector<224xf32>
    %57 = vector.shape_cast %56 : vector<224xf32> to vector<1x224xf32>
    %58 = arith.mulf %53, %53 : vector<14x224xf32>
    %cst_29 = arith.constant dense<0.000000e+00> : vector<224xf32>
    %59 = vector.multi_reduction <add>, %58, %cst_29 [0] : vector<14x224xf32> to vector<224xf32>
    %60 = vector.shape_cast %59 : vector<224xf32> to vector<1x224xf32>
    %61 = tpu.concatenate %57, %60 in 0 : vector<1x224xf32>, vector<1x224xf32> -> vector<2x224xf32>
    %c0_30 = arith.constant 0 : index
    %c0_31 = arith.constant 0 : index
    %62 = vector.load %arg6[%c0_30, %c0_31] : memref<224x224xf32, #tpu.memory_space<vmem>>, vector<224x224xf32>
    %cst_32 = arith.constant dense<0.000000e+00> : vector<2x224xf32>
    %63 = tpu.matmul %61, %62, %cst_32 {dimension_numbers = #tpu.dot_dimension_numbers<[1], [0], [0], [1], [0, 0, 1, 1], [], []>} : vector<2x224xf32>, vector<224x224xf32>, vector<2x224xf32> -> vector<2x224xf32>
    %64 = vector.extract_strided_slice %63 {offsets = [0, 0], sizes = [1, 224], strides = [1, 1]} : vector<2x224xf32> to vector<1x224xf32>
    %cst_33 = arith.constant 0.00255102036 : f32
    %65 = vector.broadcast %cst_33 : f32 to vector<1x224xf32>
    %66 = arith.mulf %64, %65 : vector<1x224xf32>
    %67 = vector.extract_strided_slice %63 {offsets = [1, 0], sizes = [1, 224], strides = [1, 1]} : vector<2x224xf32> to vector<1x224xf32>
    %cst_34 = arith.constant 0.00255102036 : f32
    %68 = vector.broadcast %cst_34 : f32 to vector<1x224xf32>
    %69 = arith.mulf %67, %68 : vector<1x224xf32>
    %70 = arith.mulf %66, %66 : vector<1x224xf32>
    %71 = arith.subf %69, %70 : vector<1x224xf32>
    %72 = vector.broadcast %66 : vector<1x224xf32> to vector<14x224xf32>
    %73 = arith.subf %53, %72 : vector<14x224xf32>
    %cst_35 = arith.constant 9.99999974E-6 : f32
    %74 = vector.broadcast %cst_35 : f32 to vector<1x224xf32>
    %75 = arith.addf %71, %74 : vector<1x224xf32>
    %76 = math.rsqrt %75 : vector<1x224xf32>
    %77 = arith.mulf %76, %54 : vector<1x224xf32>
    %78 = vector.broadcast %77 : vector<1x224xf32> to vector<14x224xf32>
    %79 = arith.mulf %73, %78 : vector<14x224xf32>
    %80 = vector.broadcast %55 : vector<1x224xf32> to vector<14x224xf32>
    %81 = arith.addf %79, %80 : vector<14x224xf32>
    %c0_36 = arith.constant 0 : index
    %c0_37 = arith.constant 0 : index
    %82 = vector.load %arg3[%c0_36, %c0_37] : memref<224x256xf32, #tpu.memory_space<vmem>>, vector<224x256xf32>
    %cst_38 = arith.constant dense<0.000000e+00> : vector<14x256xf32>
    %83 = tpu.matmul %81, %82, %cst_38 {dimension_numbers = #tpu.dot_dimension_numbers<[1], [0], [0], [1], [0, 0, 1, 1], [], []>} : vector<14x224xf32>, vector<224x256xf32>, vector<14x256xf32> -> vector<14x256xf32>
    %84 = vector.extract_strided_slice %83 {offsets = [0, 0], sizes = [1, 256], strides = [1, 1]} : vector<14x256xf32> to vector<1x256xf32>
    %85 = vector.extract_strided_slice %83 {offsets = [13, 0], sizes = [1, 256], strides = [1, 1]} : vector<14x256xf32> to vector<1x256xf32>
    %86 = tpu.concatenate %84, %83, %85 in 0 : vector<1x256xf32>, vector<14x256xf32>, vector<1x256xf32> -> vector<16x256xf32>
    %c0_39 = arith.constant 0 : index
    %c0_40 = arith.constant 0 : index
    %87 = vector.load %arg14[%c0_39, %c0_40] : memref<16x256xf32, #tpu.memory_space<vmem>>, vector<16x256xf32>
    tpu.vector_store %arg14[%c0_39, %c0_40], %86 {strides = array<i32>} : memref<16x256xf32, #tpu.memory_space<vmem>>, vector<16x256xf32>,
    %88 = vector.extract_strided_slice %86 {offsets = [0, 0], sizes = [1, 256], strides = [1, 1]} : vector<16x256xf32> to vector<1x256xf32>
    %89 = vector.extract_strided_slice %86 {offsets = [1, 0], sizes = [1, 256], strides = [1, 1]} : vector<16x256xf32> to vector<1x256xf32>
    %90 = arith.maximumf %88, %89 : vector<1x256xf32>
    %91 = vector.extract_strided_slice %86 {offsets = [2, 0], sizes = [1, 256], strides = [1, 1]} : vector<16x256xf32> to vector<1x256xf32>
    %92 = vector.extract_strided_slice %86 {offsets = [3, 0], sizes = [1, 256], strides = [1, 1]} : vector<16x256xf32> to vector<1x256xf32>
    %93 = arith.maximumf %91, %92 : vector<1x256xf32>
    %94 = vector.extract_strided_slice %86 {offsets = [4, 0], sizes = [1, 256], strides = [1, 1]} : vector<16x256xf32> to vector<1x256xf32>
    %95 = vector.extract_strided_slice %86 {offsets = [5, 0], sizes = [1, 256], strides = [1, 1]} : vector<16x256xf32> to vector<1x256xf32>
    %96 = arith.maximumf %94, %95 : vector<1x256xf32>
    %97 = vector.extract_strided_slice %86 {offsets = [6, 0], sizes = [1, 256], strides = [1, 1]} : vector<16x256xf32> to vector<1x256xf32>
    %98 = vector.extract_strided_slice %86 {offsets = [7, 0], sizes = [1, 256], strides = [1, 1]} : vector<16x256xf32> to vector<1x256xf32>
    %99 = arith.maximumf %97, %98 : vector<1x256xf32>
    %100 = vector.extract_strided_slice %86 {offsets = [8, 0], sizes = [1, 256], strides = [1, 1]} : vector<16x256xf32> to vector<1x256xf32>
    %101 = vector.extract_strided_slice %86 {offsets = [9, 0], sizes = [1, 256], strides = [1, 1]} : vector<16x256xf32> to vector<1x256xf32>
    %102 = arith.maximumf %100, %101 : vector<1x256xf32>
    %103 = vector.extract_strided_slice %86 {offsets = [10, 0], sizes = [1, 256], strides = [1, 1]} : vector<16x256xf32> to vector<1x256xf32>
    %104 = vector.extract_strided_slice %86 {offsets = [11, 0], sizes = [1, 256], strides = [1, 1]} : vector<16x256xf32> to vector<1x256xf32>
    %105 = arith.maximumf %103, %104 : vector<1x256xf32>
    %106 = vector.extract_strided_slice %86 {offsets = [12, 0], sizes = [1, 256], strides = [1, 1]} : vector<16x256xf32> to vector<1x256xf32>
    %107 = vector.extract_strided_slice %86 {offsets = [13, 0], sizes = [1, 256], strides = [1, 1]} : vector<16x256xf32> to vector<1x256xf32>
    %108 = arith.maximumf %106, %107 : vector<1x256xf32>
    %109 = vector.extract_strided_slice %86 {offsets = [14, 0], sizes = [1, 256], strides = [1, 1]} : vector<16x256xf32> to vector<1x256xf32>
    %110 = vector.extract_strided_slice %86 {offsets = [15, 0], sizes = [1, 256], strides = [1, 1]} : vector<16x256xf32> to vector<1x256xf32>
    %111 = arith.maximumf %109, %110 : vector<1x256xf32>
    %112 = tpu.concatenate %90, %93, %96, %99, %102, %105, %108, %111 in 0 : vector<1x256xf32>, vector<1x256xf32>, vector<1x256xf32>, vector<1x256xf32>, vector<1x256xf32>, vector<1x256xf32>, vector<1x256xf32>, vector<1x256xf32> -> vector<8x256xf32>
    %c0_41 = arith.constant 0 : index
    %c0_42 = arith.constant 0 : index
    %113 = vector.load %arg4[%c0_41, %c0_42] : memref<256x128xf32, #tpu.memory_space<vmem>>, vector<256x128xf32>
    %cst_43 = arith.constant dense<0.000000e+00> : vector<8x128xf32>
    %114 = tpu.matmul %112, %113, %cst_43 {dimension_numbers = #tpu.dot_dimension_numbers<[1], [0], [0], [1], [0, 0, 1, 1], [], []>} : vector<8x256xf32>, vector<256x128xf32>, vector<8x128xf32> -> vector<8x128xf32>
    %c0_44 = arith.constant 0 : index
    %c0_45 = arith.constant 0 : index
    %115 = vector.load %arg5[%c0_44, %c0_45] : memref<256x128xf32, #tpu.memory_space<vmem>>, vector<256x128xf32>
    %cst_46 = arith.constant dense<0.000000e+00> : vector<8x128xf32>
    %116 = tpu.matmul %112, %115, %cst_46 {dimension_numbers = #tpu.dot_dimension_numbers<[1], [0], [0], [1], [0, 0, 1, 1], [], []>} : vector<8x256xf32>, vector<256x128xf32>, vector<8x128xf32> -> vector<8x128xf32>
    %117 = arith.maximumf %114, %116 : vector<8x128xf32>
    %c0_47 = arith.constant 0 : index
    %c0_48 = arith.constant 0 : index
    %118 = vector.load %arg13[%c0_47, %c0_48] : memref<8x128xf32, #tpu.memory_space<vmem>>, vector<8x128xf32>
    tpu.vector_store %arg13[%c0_47, %c0_48], %117 {strides = array<i32>} : memref<8x128xf32, #tpu.memory_space<vmem>>, vector<8x128xf32>,
    return
  }
}

</mosaic_0001>

<llo_original>
// kernel: tile.33
$region0: #{tile.33}
  #allocation0 [shape = 's32[1]{0}', space=sflag, size = 0x4, scoped, tag = 'scoped memory for tile.33']
  %s0 = inlined_call_operand.vmem [shape: f32[8], index: 0, kind: input, shape index: {}]
  %s1 = inlined_call_operand.vmem [shape: f32[28,8], index: 1, kind: output, shape index: {}]
  // Predicated region
  $region2: #{tile.33} parent=0 // pred_check
    _
  $region3: #{tile.33} parent=0 // pred_check_branch
    %3 = sbr.rel (0) target = $region5
  $region4: #{tile.33} parent=0 // pred_region
    _
  $region5: #{tile.33} parent=0 // pred_fallthru
    _
  %v4 = vld [vmem:[%s0] ss:$0 sm:$0xff]
  %5 = vst [vmem:[%s1] sm:$0xff] %v4
  %s6 = scalar_lea.vmem %s1, 8
  %7 = vst [vmem:[%s6] sm:$0xff] %v4
  %s8 = scalar_lea.vmem %s1, 16
  %9 = vst [vmem:[%s8] sm:$0xff] %v4
  %s10 = scalar_lea.vmem %s1, 24
  %11 = vst [vmem:[%s10] sm:$0xff] %v4

// kernel: tile.34
$region0: #{tile.34}
  %s0 = inlined_call_operand.vmem [shape: f32[28,8], index: 0, kind: input, shape index: {}]
  %s1 = inlined_call_operand.vmem [shape: f32[1,224], index: 1, kind: output, shape index: {}]
  $region1: #{tile.34} parent=0
    #allocation0 [shape = 'u8[8192]{0}', space=vmem, size = 0x2000, scoped, tag = 'scoped mem for output reshape']
    %s2 = smov 3
    %v3 = vld [vmem:[%s0] ss:$16 sm:%s2]
    %vm4 = vcmask 64512
    %5 = vst.msk [vmem:[#allocation0] ss:$8 sm:$0x3] %vm4, %v3
    %s6 = scalar_lea.vmem %s0, 15
    %v7 = vld [vmem:[%s6] sm:$0x1]
    %8 = vrot.lane.b32.xlu0 %v7, 120
    %v9 = vpop.permute.xlu0 %8
    %vm10 = vcmask 1048512
    %11 = vst.msk [vmem:[#allocation0] sm:$0x1] %vm10, %v9
    %s12 = scalar_lea.vmem %s0, 14
    %v13 = vld [vmem:[%s12] sm:$0x1]
    %14 = vrot.lane.b32.xlu0 %v13, 112
    %v15 = vpop.permute.xlu0 %14
    %vm16 = vcmask 982912
    %17 = vst.msk [vmem:[#allocation0] sm:$0x1] %vm16, %v15
    %s18 = scalar_lea.vmem %s0, 13
    %v19 = vld [vmem:[%s18] sm:$0x1]
    %20 = vrot.lane.b32.xlu0 %v19, 104
    %v21 = vpop.permute.xlu0 %20
    %vm22 = vcmask 917312
    %23 = vst.msk [vmem:[#allocation0] sm:$0x1] %vm22, %v21
    %s24 = scalar_lea.vmem %s0, 12
    %v25 = vld [vmem:[%s24] sm:$0x1]
    %26 = vrot.lane.b32.xlu0 %v25, 96
    %v27 = vpop.permute.xlu0 %26
    %vm28 = vcmask 851712
    %29 = vst.msk [vmem:[#allocation0] sm:$0x1] %vm28, %v27
    %s30 = scalar_lea.vmem %s0, 11
    %s31 = smov 3
    %v32 = vld [vmem:[%s30] ss:$16 sm:%s31]
    %33 = vrot.lane.b32.xlu0 %v32, 88
    %v34 = vpop.permute.xlu0 %33
    %vm35 = vcmask 786112
    %36 = vst.msk [vmem:[#allocation0] ss:$8 sm:$0x3] %vm35, %v34
    %s37 = scalar_lea.vmem %s0, 10
    %s38 = smov 3
    %v39 = vld [vmem:[%s37] ss:$16 sm:%s38]
    %40 = vrot.lane.b32.xlu0 %v39, 80
    %v41 = vpop.permute.xlu0 %40
    %vm42 = vcmask 720512
    %43 = vst.msk [vmem:[#allocation0] ss:$8 sm:$0x3] %vm42, %v41
    %s44 = scalar_lea.vmem %s0, 9
    %s45 = smov 3
    %v46 = vld [vmem:[%s44] ss:$16 sm:%s45]
    %47 = vrot.lane.b32.xlu0 %v46, 72
    %v48 = vpop.permute.xlu0 %47
    %vm49 = vcmask 654912
    %50 = vst.msk [vmem:[#allocation0] ss:$8 sm:$0x3] %vm49, %v48
    %s51 = scalar_lea.vmem %s0, 8
    %s52 = smov 3
    %v53 = vld [vmem:[%s51] ss:$16 sm:%s52]
    %54 = vrot.lane.b32.xlu0 %v53, 64
    %v55 = vpop.permute.xlu0 %54
    %vm56 = vcmask 589312
    %57 = vst.msk [vmem:[#allocation0] ss:$8 sm:$0x3] %vm56, %v55
    %s58 = scalar_lea.vmem %s0, 7
    %s59 = smov 3
    %v60 = vld [vmem:[%s58] ss:$16 sm:%s59]
    %61 = vrot.lane.b32.xlu0 %v60, 56
    %v62 = vpop.permute.xlu0 %61
    %vm63 = vcmask 523712
    %64 = vst.msk [vmem:[#allocation0] ss:$8 sm:$0x3] %vm63, %v62
    %s65 = scalar_lea.vmem %s0, 6
    %s66 = smov 3
    %v67 = vld [vmem:[%s65] ss:$16 sm:%s66]
    %68 = vrot.lane.b32.xlu0 %v67, 48
    %v69 = vpop.permute.xlu0 %68
    %vm70 = vcmask 458112
    %71 = vst.msk [vmem:[#allocation0] ss:$8 sm:$0x3] %vm70, %v69
    %s72 = scalar_lea.vmem %s0, 5
    %s73 = smov 3
    %v74 = vld [vmem:[%s72] ss:$16 sm:%s73]
    %75 = vrot.lane.b32.xlu0 %v74, 40
    %v76 = vpop.permute.xlu0 %75
    %vm77 = vcmask 392512
    %78 = vst.msk [vmem:[#allocation0] ss:$8 sm:$0x3] %vm77, %v76
    %s79 = scalar_lea.vmem %s0, 4
    %s80 = smov 3
    %v81 = vld [vmem:[%s79] ss:$16 sm:%s80]
    %82 = vrot.lane.b32.xlu0 %v81, 32
    %v83 = vpop.permute.xlu0 %82
    %vm84 = vcmask 326912
    %85 = vst.msk [vmem:[#allocation0] ss:$8 sm:$0x3] %vm84, %v83
    %s86 = scalar_lea.vmem %s0, 3
    %s87 = smov 3
    %v88 = vld [vmem:[%s86] ss:$16 sm:%s87]
    %89 = vrot.lane.b32.xlu0 %v88, 24
    %v90 = vpop.permute.xlu0 %89
    %vm91 = vcmask 261312
    %92 = vst.msk [vmem:[#allocation0] ss:$8 sm:$0x3] %vm91, %v90
    %s93 = scalar_lea.vmem %s0, 2
    %s94 = smov 3
    %v95 = vld [vmem:[%s93] ss:$16 sm:%s94]
    %96 = vrot.lane.b32.xlu0 %v95, 16
    %v97 = vpop.permute.xlu0 %96
    %vm98 = vcmask 195712
    %99 = vst.msk [vmem:[#allocation0] ss:$8 sm:$0x3] %vm98, %v97
    %s100 = scalar_lea.vmem %s0, 1
    %s101 = smov 3
    %v102 = vld [vmem:[%s100] ss:$16 sm:%s101]
    %103 = vrot.lane.b32.xlu0 %v102, 8
    %v104 = vpop.permute.xlu0 %103
    %vm105 = vcmask 130112
    %106 = vst.msk [vmem:[#allocation0] ss:$8 sm:$0x3] %vm105, %v104
    %s108 = sshll.u32 1, 1
    %s109 = ssub.s32 %s108, 1
    %v111 = vld [vmem:[#allocation0] sm:%s109]
    %s112 = sshll.u32 1, 1
    %s113 = ssub.s32 %s112, 1
    %114 = vst [vmem:[%s1] sm:%s113] %v111
    %s115 = scalar_lea.vmem [#allocation0], 8
    %v116 = vld [vmem:[%s115] sm:%s109]
    %s117 = sshll.u32 1, 1
    %s118 = ssub.s32 %s117, 1
    %s119 = scalar_lea.vmem %s1, 1
    %120 = vst [vmem:[%s119] sm:%s118] %v116

// kernel: wnet_down_conv_block.1
$region0: #{wnet_down_conv_block.1}
  #allocation0 [shape = 'u32[]', space=smem, size = 0x4, offset = 0x4, fixed_abs, tag = 'smem constant byte address 0x4 - core index']
  #allocation1 [shape = 'u32[144,128]{1,0:T(1,128)}', space=vmem, size = 0x12000, scoped, tag = 'internal scratch']
  %s0 = inlined_call_operand.vmem [shape: f32[16,128], index: 0, kind: input, shape index: {}]
  %s1 = inlined_call_operand.vmem [shape: f32[384,224], index: 1, kind: input, shape index: {}]
  %s2 = inlined_call_operand.vmem [shape: f32[672,224], index: 2, kind: input, shape index: {}]
  %s3 = inlined_call_operand.vmem [shape: f32[224,256], index: 3, kind: input, shape index: {}]
  %s4 = inlined_call_operand.vmem [shape: f32[256,128], index: 4, kind: input, shape index: {}]
  %s5 = inlined_call_operand.vmem [shape: f32[256,128], index: 5, kind: input, shape index: {}]
  %s6 = inlined_call_operand.vmem [shape: f32[224,224], index: 6, kind: input, shape index: {}]
  %s7 = inlined_call_operand.vmem [shape: f32[1,224], index: 7, kind: input, shape index: {}]
  %s8 = inlined_call_operand.vmem [shape: f32[1,224], index: 8, kind: input, shape index: {}]
  %s9 = inlined_call_operand.vmem [shape: f32[1,224], index: 9, kind: input, shape index: {}]
  %s10 = inlined_call_operand.vmem [shape: f32[1,224], index: 10, kind: input, shape index: {}]
  %s11 = inlined_call_operand.vmem [shape: f32[1,224], index: 11, kind: input, shape index: {}]
  %s12 = inlined_call_operand.vmem [shape: f32[1,224], index: 12, kind: input, shape index: {}]
  %s13 = inlined_call_operand.vmem [shape: f32[8,128], index: 13, kind: output, shape index: {0}]
  %s14 = inlined_call_operand.vmem [shape: f32[16,256], index: 14, kind: output, shape index: {1}]
  %15 = xla_tuple %s13, %s14
  %s16 = sld [smem:[#allocation0]]
  $region70: #{wnet_down_conv_block.1} parent=0
    _
  %s18 = ssub.s32 1, %s16
  %s19 = scalar_select 0, %s18, %s16
  // Predicated region
  $region2: #{wnet_down_conv_block.1} parent=0 // pred_check
    _
  $region3: #{wnet_down_conv_block.1} parent=0 // pred_check_branch
    %21 = sbr.rel (0) target = $region5
  $region4: #{wnet_down_conv_block.1} parent=0 // pred_region
    _
  $region5: #{wnet_down_conv_block.1} parent=0 // pred_fallthru
    _
  // Predicated region
  $region6: #{wnet_down_conv_block.1} parent=0 // pred_check
    _
  $region7: #{wnet_down_conv_block.1} parent=0 // pred_check_branch
    %23 = sbr.rel (0) target = $region9
  $region8: #{wnet_down_conv_block.1} parent=0 // pred_region
    _
  $region9: #{wnet_down_conv_block.1} parent=0 // pred_fallthru
    _
  // Predicated region
  $region10: #{wnet_down_conv_block.1} parent=0 // pred_check
    _
  $region11: #{wnet_down_conv_block.1} parent=0 // pred_check_branch
    %25 = sbr.rel (0) target = $region13
  $region12: #{wnet_down_conv_block.1} parent=0 // pred_region
    _
  $region13: #{wnet_down_conv_block.1} parent=0 // pred_fallthru
    _
  // Predicated region
  $region14: #{wnet_down_conv_block.1} parent=0 // pred_check
    _
  $region15: #{wnet_down_conv_block.1} parent=0 // pred_check_branch
    %27 = sbr.rel (0) target = $region17
  $region16: #{wnet_down_conv_block.1} parent=0 // pred_region
    _
  $region17: #{wnet_down_conv_block.1} parent=0 // pred_fallthru
    _
  // Predicated region
  $region18: #{wnet_down_conv_block.1} parent=0 // pred_check
    _
  $region19: #{wnet_down_conv_block.1} parent=0 // pred_check_branch
    %29 = sbr.rel (0) target = $region21
  $region20: #{wnet_down_conv_block.1} parent=0 // pred_region
    _
  $region21: #{wnet_down_conv_block.1} parent=0 // pred_fallthru
    _
  // Predicated region
  $region22: #{wnet_down_conv_block.1} parent=0 // pred_check
    _
  $region23: #{wnet_down_conv_block.1} parent=0 // pred_check_branch
    %31 = sbr.rel (0) target = $region25
  $region24: #{wnet_down_conv_block.1} parent=0 // pred_region
    _
  $region25: #{wnet_down_conv_block.1} parent=0 // pred_fallthru
    _
  // Predicated region
  $region26: #{wnet_down_conv_block.1} parent=0 // pred_check
    _
  $region27: #{wnet_down_conv_block.1} parent=0 // pred_check_branch
    %33 = sbr.rel (0) target = $region29
  $region28: #{wnet_down_conv_block.1} parent=0 // pred_region
    _
  $region29: #{wnet_down_conv_block.1} parent=0 // pred_fallthru
    _
  // Predicated region
  $region30: #{wnet_down_conv_block.1} parent=0 // pred_check
    _
  $region31: #{wnet_down_conv_block.1} parent=0 // pred_check_branch
    %35 = sbr.rel (0) target = $region33
  $region32: #{wnet_down_conv_block.1} parent=0 // pred_region
    _
  $region33: #{wnet_down_conv_block.1} parent=0 // pred_fallthru
    _
  // Predicated region
  $region34: #{wnet_down_conv_block.1} parent=0 // pred_check
    _
  $region35: #{wnet_down_conv_block.1} parent=0 // pred_check_branch
    %37 = sbr.rel (0) target = $region37
  $region36: #{wnet_down_conv_block.1} parent=0 // pred_region
    _
  $region37: #{wnet_down_conv_block.1} parent=0 // pred_fallthru
    _
  // Predicated region
  $region38: #{wnet_down_conv_block.1} parent=0 // pred_check
    _
  $region39: #{wnet_down_conv_block.1} parent=0 // pred_check_branch
    %39 = sbr.rel (0) target = $region41
  $region40: #{wnet_down_conv_block.1} parent=0 // pred_region
    _
  $region41: #{wnet_down_conv_block.1} parent=0 // pred_fallthru
    _
  // Predicated region
  $region42: #{wnet_down_conv_block.1} parent=0 // pred_check
    _
  $region43: #{wnet_down_conv_block.1} parent=0 // pred_check_branch
    %41 = sbr.rel (0) target = $region45
  $region44: #{wnet_down_conv_block.1} parent=0 // pred_region
    _
  $region45: #{wnet_down_conv_block.1} parent=0 // pred_fallthru
    _
  // Predicated region
  $region46: #{wnet_down_conv_block.1} parent=0 // pred_check
    _
  $region47: #{wnet_down_conv_block.1} parent=0 // pred_check_branch
    %43 = sbr.rel (0) target = $region49
  $region48: #{wnet_down_conv_block.1} parent=0 // pred_region
    _
  $region49: #{wnet_down_conv_block.1} parent=0 // pred_fallthru
    _
  // Predicated region
  $region50: #{wnet_down_conv_block.1} parent=0 // pred_check
    _
  $region51: #{wnet_down_conv_block.1} parent=0 // pred_check_branch
    %45 = sbr.rel (0) target = $region53
  $region52: #{wnet_down_conv_block.1} parent=0 // pred_region
    _
  $region53: #{wnet_down_conv_block.1} parent=0 // pred_fallthru
    _
  %v46 = vld [vmem:[%s0] sm:$0xff]
  %v47 = vld [vmem:[%s0 + $0x8] sm:$0xff]
  %v48 = vld [vmem:[%s7] sm:$0x3]
  %vm51 = vcmask 1046528
  %v52 = vrot.slane %v46, 1
  %v53 = vrot.slane %v47, 1
  %v54 = vsel %vm51, %v52, %v53
  %vm57 = vcmask 1045504
  %v58 = vrot.slane %v46, 2
  %v59 = vrot.slane %v47, 2
  %v60 = vsel %vm57, %v58, %v59
  %v63 = vld [vmem:[%s1] sm:$0xff]
  %v64 = vld [vmem:[%s1 + $0x8] sm:$0xff]
  %v65 = vld [vmem:[%s1 + $0x10] sm:$0xff]
  %v66 = vld [vmem:[%s1 + $0x18] sm:$0xff]
  %v67 = vld [vmem:[%s1 + $0x20] sm:$0xff]
  %v68 = vld [vmem:[%s1 + $0x28] sm:$0xff]
  %v69 = vld [vmem:[%s1 + $0x30] sm:$0xff]
  %v70 = vld [vmem:[%s1 + $0x38] sm:$0xff]
  %v71 = vld [vmem:[%s1 + $0x40] sm:$0xff]
  %v72 = vld [vmem:[%s1 + $0x48] sm:$0xff]
  %v73 = vld [vmem:[%s1 + $0x50] sm:$0xff]
  %v74 = vld [vmem:[%s1 + $0x58] sm:$0xff]
  %v75 = vld [vmem:[%s1 + $0x60] sm:$0xff]
  %v76 = vld [vmem:[%s1 + $0x68] sm:$0xff]
  %v77 = vld [vmem:[%s1 + $0x70] sm:$0xff]
  %v78 = vld [vmem:[%s1 + $0x78] sm:$0xff]
  %v79 = vld [vmem:[%s1 + $0x80] sm:$0xff]
  %v80 = vld [vmem:[%s1 + $0x88] sm:$0xff]
  %v81 = vld [vmem:[%s1 + $0x90] sm:$0xff]
  %v82 = vld [vmem:[%s1 + $0x98] sm:$0xff]
  %v83 = vld [vmem:[%s1 + $0xa0] sm:$0xff]
  %v84 = vld [vmem:[%s1 + $0xa8] sm:$0xff]
  %v85 = vld [vmem:[%s1 + $0xb0] sm:$0xff]
  %v86 = vld [vmem:[%s1 + $0xb8] sm:$0xff]
  %v87 = vld [vmem:[%s1 + $0xc0] sm:$0xff]
  %v88 = vld [vmem:[%s1 + $0xc8] sm:$0xff]
  %v89 = vld [vmem:[%s1 + $0xd0] sm:$0xff]
  %v90 = vld [vmem:[%s1 + $0xd8] sm:$0xff]
  %v91 = vld [vmem:[%s1 + $0xe0] sm:$0xff]
  %v92 = vld [vmem:[%s1 + $0xe8] sm:$0xff]
  %v93 = vld [vmem:[%s1 + $0xf0] sm:$0xff]
  %v94 = vld [vmem:[%s1 + $0xf8] sm:$0xff]
  %v95 = vld [vmem:[%s1 + $0x100] sm:$0xff]
  %v96 = vld [vmem:[%s1 + $0x108] sm:$0xff]
  %v97 = vld [vmem:[%s1 + $0x110] sm:$0xff]
  %v98 = vld [vmem:[%s1 + $0x118] sm:$0xff]
  %v99 = vld [vmem:[%s1 + $0x120] sm:$0xff]
  %v100 = vld [vmem:[%s1 + $0x128] sm:$0xff]
  %v101 = vld [vmem:[%s1 + $0x130] sm:$0xff]
  %v102 = vld [vmem:[%s1 + $0x138] sm:$0xff]
  %v103 = vld [vmem:[%s1 + $0x140] sm:$0xff]
  %v104 = vld [vmem:[%s1 + $0x148] sm:$0xff]
  %v105 = vld [vmem:[%s1 + $0x150] sm:$0xff]
  %v106 = vld [vmem:[%s1 + $0x158] sm:$0xff]
  %v107 = vld [vmem:[%s1 + $0x160] sm:$0xff]
  %v108 = vld [vmem:[%s1 + $0x168] sm:$0xff]
  %v109 = vld [vmem:[%s1 + $0x170] sm:$0xff]
  %v110 = vld [vmem:[%s1 + $0x178] sm:$0xff]
  %v111 = vld [vmem:[%s1 + $0x180] sm:$0xff]
  %v112 = vld [vmem:[%s1 + $0x188] sm:$0xff]
  %v113 = vld [vmem:[%s1 + $0x190] sm:$0xff]
  %v114 = vld [vmem:[%s1 + $0x198] sm:$0xff]
  %v115 = vld [vmem:[%s1 + $0x1a0] sm:$0xff]
  %v116 = vld [vmem:[%s1 + $0x1a8] sm:$0xff]
  %v117 = vld [vmem:[%s1 + $0x1b0] sm:$0xff]
  %v118 = vld [vmem:[%s1 + $0x1b8] sm:$0xff]
  %v119 = vld [vmem:[%s1 + $0x1c0] sm:$0xff]
  %v120 = vld [vmem:[%s1 + $0x1c8] sm:$0xff]
  %v121 = vld [vmem:[%s1 + $0x1d0] sm:$0xff]
  %v122 = vld [vmem:[%s1 + $0x1d8] sm:$0xff]
  %v123 = vld [vmem:[%s1 + $0x1e0] sm:$0xff]
  %v124 = vld [vmem:[%s1 + $0x1e8] sm:$0xff]
  %v125 = vld [vmem:[%s1 + $0x1f0] sm:$0xff]
  %v126 = vld [vmem:[%s1 + $0x1f8] sm:$0xff]
  %v127 = vld [vmem:[%s1 + $0x200] sm:$0xff]
  %v128 = vld [vmem:[%s1 + $0x208] sm:$0xff]
  %v129 = vld [vmem:[%s1 + $0x210] sm:$0xff]
  %v130 = vld [vmem:[%s1 + $0x218] sm:$0xff]
  %v131 = vld [vmem:[%s1 + $0x220] sm:$0xff]
  %v132 = vld [vmem:[%s1 + $0x228] sm:$0xff]
  %v133 = vld [vmem:[%s1 + $0x230] sm:$0xff]
  %v134 = vld [vmem:[%s1 + $0x238] sm:$0xff]
  %v135 = vld [vmem:[%s1 + $0x240] sm:$0xff]
  %v136 = vld [vmem:[%s1 + $0x248] sm:$0xff]
  %v137 = vld [vmem:[%s1 + $0x250] sm:$0xff]
  %v138 = vld [vmem:[%s1 + $0x258] sm:$0xff]
  %v139 = vld [vmem:[%s1 + $0x260] sm:$0xff]
  %v140 = vld [vmem:[%s1 + $0x268] sm:$0xff]
  %v141 = vld [vmem:[%s1 + $0x270] sm:$0xff]
  %v142 = vld [vmem:[%s1 + $0x278] sm:$0xff]
  %v143 = vld [vmem:[%s1 + $0x280] sm:$0xff]
  %v144 = vld [vmem:[%s1 + $0x288] sm:$0xff]
  %v145 = vld [vmem:[%s1 + $0x290] sm:$0xff]
  %v146 = vld [vmem:[%s1 + $0x298] sm:$0xff]
  %v147 = vld [vmem:[%s1 + $0x2a0] sm:$0xff]
  %v148 = vld [vmem:[%s1 + $0x2a8] sm:$0xff]
  %v149 = vld [vmem:[%s1 + $0x2b0] sm:$0xff]
  %v150 = vld [vmem:[%s1 + $0x2b8] sm:$0xff]
  %v151 = vld [vmem:[%s1 + $0x2c0] sm:$0xff]
  %v152 = vld [vmem:[%s1 + $0x2c8] sm:$0xff]
  %v153 = vld [vmem:[%s1 + $0x2d0] sm:$0xff]
  %v154 = vld [vmem:[%s1 + $0x2d8] sm:$0xff]
  %v155 = vld [vmem:[%s1 + $0x2e0] sm:$0xff]
  %v156 = vld [vmem:[%s1 + $0x2e8] sm:$0xff]
  %v157 = vld [vmem:[%s1 + $0x2f0] sm:$0xff]
  %v158 = vld [vmem:[%s1 + $0x2f8] sm:$0xff]
  %v160 = vlaneseq
  %v161 = vshrl.u32 %v160, 7
  %v162 = vsub.s32 0, %v161
  %v163 = vrot.slane %v48, %v162
  %v164 = vlaneseq
  %v165 = vshrl.u32 %v164, 7
  %v166 = vsub.s32 1, %v165
  %v167 = vrot.slane %v48, %v166
  %170 = vmatprep.subr.mxu0 %v94
  %171 = vmatpush1.msra.mxu0 %v93
  %172 = vmatprep.subr.mxu0 %v92
  %173 = vmatpush1.msra.mxu0 %v91
  %174 = vmatprep.subr.mxu0 %v90
  %175 = vmatpush1.msra.mxu0 %v89
  %176 = vmatprep.subr.mxu0 %v88
  %177 = vmatpush1.msra.mxu0 %v87
  %178 = vmatprep.subr.mxu0 %v86
  %179 = vmatpush1.msra.mxu0 %v85
  %180 = vmatprep.subr.mxu0 %v84
  %181 = vmatpush1.msra.mxu0 %v83
  %182 = vmatprep.subr.mxu0 %v82
  %183 = vmatpush1.msra.mxu0 %v81
  %184 = vmatprep.subr.mxu0 %v80
  %185 = vmatpush1.msra.mxu0 %v79
  %186 = vmatprep.subr.mxu0 %v78
  %187 = vmatpush1.msra.mxu0 %v77
  %188 = vmatprep.subr.mxu0 %v76
  %189 = vmatpush1.msra.mxu0 %v75
  %190 = vmatprep.subr.mxu0 %v74
  %191 = vmatpush1.msra.mxu0 %v73
  %192 = vmatprep.subr.mxu0 %v72
  %193 = vmatpush1.msra.mxu0 %v71
  %194 = vmatprep.subr.mxu0 %v70
  %195 = vmatpush1.msra.mxu0 %v69
  %196 = vmatprep.subr.mxu0 %v68
  %197 = vmatpush1.msra.mxu0 %v67
  %198 = vmatprep.subr.mxu0 %v66
  %199 = vmatpush1.msra.mxu0 %v65
  %200 = vmatprep.subr.mxu0 %v64
  %201 = vmatpush1.msra.mxu0 %v63
  %202 = vmatprep.subr.mxu0 %v126
  %203 = vmatpush2.msra.mxu0 %v125
  %204 = vmatprep.subr.mxu0 %v124
  %205 = vmatpush2.msra.mxu0 %v123
  %206 = vmatprep.subr.mxu0 %v122
  %207 = vmatpush2.msra.mxu0 %v121
  %208 = vmatprep.subr.mxu0 %v120
  %209 = vmatpush2.msra.mxu0 %v119
  %210 = vmatprep.subr.mxu0 %v118
  %211 = vmatpush2.msra.mxu0 %v117
  %212 = vmatprep.subr.mxu0 %v116
  %213 = vmatpush2.msra.mxu0 %v115
  %214 = vmatprep.subr.mxu0 %v114
  %215 = vmatpush2.msra.mxu0 %v113
  %216 = vmatprep.subr.mxu0 %v112
  %217 = vmatpush2.msra.mxu0 %v111
  %218 = vmatprep.subr.mxu0 %v110
  %219 = vmatpush2.msra.mxu0 %v109
  %220 = vmatprep.subr.mxu0 %v108
  %221 = vmatpush2.msra.mxu0 %v107
  %222 = vmatprep.subr.mxu0 %v106
  %223 = vmatpush2.msra.mxu0 %v105
  %224 = vmatprep.subr.mxu0 %v104
  %225 = vmatpush2.msra.mxu0 %v103
  %226 = vmatprep.subr.mxu0 %v102
  %227 = vmatpush2.msra.mxu0 %v101
  %228 = vmatprep.subr.mxu0 %v100
  %229 = vmatpush2.msra.mxu0 %v99
  %230 = vmatprep.subr.mxu0 %v98
  %231 = vmatpush2.msra.mxu0 %v97
  %232 = vmatprep.subr.mxu0 %v96
  %233 = vmatpush2.msra.mxu0 %v95
  %234 = vmatprep.mubr.f32.mxu0 %v54
  %235 = vmatmul.mubr.f32.gmra.mxu0 %v46
  %v236 = vpop.f32.mrf.mxu0
  %v237 = vadd.f32 %v163, %v236
  %v238 = vpop.f32.mrf.mxu0
  %v239 = vadd.f32 %v167, %v238
  %240 = vmatprep.mubr.f32.mxu0 %v53
  %241 = vmatmul.mubr.f32.gmra.mxu0 %v47
  %v242 = vpop.f32.mrf.mxu0
  %v243 = vadd.f32 %v163, %v242
  %v244 = vpop.f32.mrf.mxu0
  %v245 = vadd.f32 %v167, %v244
  %246 = vdwg.mxu0
  %247 = vmatprep.subr.mxu0 %v158
  %248 = vmatpush1.msra.mxu0 %v157
  %249 = vmatprep.subr.mxu0 %v156
  %250 = vmatpush1.msra.mxu0 %v155
  %251 = vmatprep.subr.mxu0 %v154
  %252 = vmatpush1.msra.mxu0 %v153
  %253 = vmatprep.subr.mxu0 %v152
  %254 = vmatpush1.msra.mxu0 %v151
  %255 = vmatprep.subr.mxu0 %v150
  %256 = vmatpush1.msra.mxu0 %v149
  %257 = vmatprep.subr.mxu0 %v148
  %258 = vmatpush1.msra.mxu0 %v147
  %259 = vmatprep.subr.mxu0 %v146
  %260 = vmatpush1.msra.mxu0 %v145
  %261 = vmatprep.subr.mxu0 %v144
  %262 = vmatpush1.msra.mxu0 %v143
  %263 = vmatprep.subr.mxu0 %v142
  %264 = vmatpush1.msra.mxu0 %v141
  %265 = vmatprep.subr.mxu0 %v140
  %266 = vmatpush1.msra.mxu0 %v139
  %267 = vmatprep.subr.mxu0 %v138
  %268 = vmatpush1.msra.mxu0 %v137
  %269 = vmatprep.subr.mxu0 %v136
  %270 = vmatpush1.msra.mxu0 %v135
  %271 = vmatprep.subr.mxu0 %v134
  %272 = vmatpush1.msra.mxu0 %v133
  %273 = vmatprep.subr.mxu0 %v132
  %274 = vmatpush1.msra.mxu0 %v131
  %275 = vmatprep.subr.mxu0 %v130
  %276 = vmatpush1.msra.mxu0 %v129
  %277 = vmatprep.subr.mxu0 %v128
  %278 = vmatpush1.msra.mxu0 %v127
  %279 = vmatprep.subr.mxu0 0.0
  %280 = vmatpush2.msra.mxu0 0.0
  %281 = vmatprep.subr.mxu0 0.0
  %282 = vmatpush2.msra.mxu0 0.0
  %283 = vmatprep.subr.mxu0 0.0
  %284 = vmatpush2.msra.mxu0 0.0
  %285 = vmatprep.subr.mxu0 0.0
  %286 = vmatpush2.msra.mxu0 0.0
  %287 = vmatprep.subr.mxu0 0.0
  %288 = vmatpush2.msra.mxu0 0.0
  %289 = vmatprep.subr.mxu0 0.0
  %290 = vmatpush2.msra.mxu0 0.0
  %291 = vmatprep.subr.mxu0 0.0
  %292 = vmatpush2.msra.mxu0 0.0
  %293 = vmatprep.subr.mxu0 0.0
  %294 = vmatpush2.msra.mxu0 0.0
  %295 = vmatprep.subr.mxu0 0.0
  %296 = vmatpush2.msra.mxu0 0.0
  %297 = vmatprep.subr.mxu0 0.0
  %298 = vmatpush2.msra.mxu0 0.0
  %299 = vmatprep.subr.mxu0 0.0
  %300 = vmatpush2.msra.mxu0 0.0
  %301 = vmatprep.subr.mxu0 0.0
  %302 = vmatpush2.msra.mxu0 0.0
  %303 = vmatprep.subr.mxu0 0.0
  %304 = vmatpush2.msra.mxu0 0.0
  %305 = vmatprep.subr.mxu0 0.0
  %306 = vmatpush2.msra.mxu0 0.0
  %307 = vmatprep.subr.mxu0 0.0
  %308 = vmatpush2.msra.mxu0 0.0
  %309 = vmatprep.subr.mxu0 0.0
  %310 = vmatpush2.msra.mxu0 0.0
  %311 = vmatprep.mubr.f32.mxu0 0.0
  %312 = vmatmul.mubr.f32.gmra.mxu0 %v60
  %v313 = vpop.f32.mrf.mxu0
  %v314 = vadd.f32 %v237, %v313
  %v315 = vpop.f32.mrf.mxu0
  %v316 = vadd.f32 %v239, %v315
  %317 = vmatprep.mubr.f32.mxu0 0.0
  %318 = vmatmul.mubr.f32.gmra.mxu0 %v59
  %v319 = vpop.f32.mrf.mxu0
  %v320 = vadd.f32 %v243, %v319
  %v321 = vpop.f32.mrf.mxu0
  %v322 = vadd.f32 %v245, %v321
  %323 = vdwg.mxu0
  %v324 = vmax.f32 %v314, 0.0
  %v325 = vmax.f32 %v316, 0.0
  %v326 = vmax.f32 %v320, 0.0
  %v327 = vmax.f32 %v322, 0.0
  %v328 = vld [vmem:[%s8] sm:$0x3]
  %v329 = vld [vmem:[%s9] sm:$0x3]
  %v330 = vsel %vm57, %v326, 0.0
  %v331 = vadd.f32 %v324, %v330
  %v332 = vrot.slane %v331, 4
  %v333 = vadd.f32 %v331, %v332
  %v334 = vrot.slane %v333, 2
  %v335 = vadd.f32 %v333, %v334
  %v336 = vrot.slane %v335, 1
  %v337 = vadd.f32 %v335, %v336
  %vm338 = vcmask 785408
  %v339 = vsel %vm338, %v325, 0.0
  %vm340 = vcmask 783360
  %v341 = vsel %vm340, %v327, 0.0
  %v342 = vadd.f32 %v339, %v341
  %v343 = vrot.slane %v342, 4
  %v344 = vadd.f32 %v342, %v343
  %v345 = vrot.slane %v344, 2
  %v346 = vadd.f32 %v344, %v345
  %v347 = vrot.slane %v346, 1
  %v348 = vadd.f32 %v346, %v347
  %v349 = vmul.f32 %v324, %v324
  %v350 = vmul.f32 %v325, %v325
  %v351 = vmul.f32 %v326, %v326
  %v352 = vmul.f32 %v327, %v327
  %v353 = vsel %vm57, %v351, 0.0
  %v354 = vadd.f32 %v349, %v353
  %v355 = vrot.slane %v354, 4
  %v356 = vadd.f32 %v354, %v355
  %v357 = vrot.slane %v356, 2
  %v358 = vadd.f32 %v356, %v357
  %v359 = vrot.slane %v358, 1
  %v360 = vadd.f32 %v358, %v359
  %v361 = vsel %vm338, %v350, 0.0
  %v362 = vsel %vm340, %v352, 0.0
  %v363 = vadd.f32 %v361, %v362
  %v364 = vrot.slane %v363, 4
  %v365 = vadd.f32 %v363, %v364
  %v366 = vrot.slane %v365, 2
  %v367 = vadd.f32 %v365, %v366
  %v368 = vrot.slane %v367, 1
  %v369 = vadd.f32 %v367, %v368
  %vm370 = vcmask 1040384
  %v371 = vsel %vm370, %v337, %v360
  %v372 = vsel %vm370, %v348, %v369
  %v373 = vld [vmem:[%s6] sm:$0xff]
  %v374 = vld [vmem:[%s6 + $0x8] sm:$0xff]
  %v375 = vld [vmem:[%s6 + $0x10] sm:$0xff]
  %v376 = vld [vmem:[%s6 + $0x18] sm:$0xff]
  %v377 = vld [vmem:[%s6 + $0x20] sm:$0xff]
  %v378 = vld [vmem:[%s6 + $0x28] sm:$0xff]
  %v379 = vld [vmem:[%s6 + $0x30] sm:$0xff]
  %v380 = vld [vmem:[%s6 + $0x38] sm:$0xff]
  %v381 = vld [vmem:[%s6 + $0x40] sm:$0xff]
  %v382 = vld [vmem:[%s6 + $0x48] sm:$0xff]
  %v383 = vld [vmem:[%s6 + $0x50] sm:$0xff]
  %v384 = vld [vmem:[%s6 + $0x58] sm:$0xff]
  %v385 = vld [vmem:[%s6 + $0x60] sm:$0xff]
  %v386 = vld [vmem:[%s6 + $0x68] sm:$0xff]
  %v387 = vld [vmem:[%s6 + $0x70] sm:$0xff]
  %v388 = vld [vmem:[%s6 + $0x78] sm:$0xff]
  %v389 = vld [vmem:[%s6 + $0x80] sm:$0xff]
  %v390 = vld [vmem:[%s6 + $0x88] sm:$0xff]
  %v391 = vld [vmem:[%s6 + $0x90] sm:$0xff]
  %v392 = vld [vmem:[%s6 + $0x98] sm:$0xff]
  %v393 = vld [vmem:[%s6 + $0xa0] sm:$0xff]
  %v394 = vld [vmem:[%s6 + $0xa8] sm:$0xff]
  %v395 = vld [vmem:[%s6 + $0xb0] sm:$0xff]
  %v396 = vld [vmem:[%s6 + $0xb8] sm:$0xff]
  %v397 = vld [vmem:[%s6 + $0xc0] sm:$0xff]
  %v398 = vld [vmem:[%s6 + $0xc8] sm:$0xff]
  %v399 = vld [vmem:[%s6 + $0xd0] sm:$0xff]
  %v400 = vld [vmem:[%s6 + $0xd8] sm:$0xff]
  %v401 = vld [vmem:[%s6 + $0xe0] sm:$0xff]
  %v402 = vld [vmem:[%s6 + $0xe8] sm:$0xff]
  %v403 = vld [vmem:[%s6 + $0xf0] sm:$0xff]
  %v404 = vld [vmem:[%s6 + $0xf8] sm:$0xff]
  %v405 = vld [vmem:[%s6 + $0x100] sm:$0xff]
  %v406 = vld [vmem:[%s6 + $0x108] sm:$0xff]
  %v407 = vld [vmem:[%s6 + $0x110] sm:$0xff]
  %v408 = vld [vmem:[%s6 + $0x118] sm:$0xff]
  %v409 = vld [vmem:[%s6 + $0x120] sm:$0xff]
  %v410 = vld [vmem:[%s6 + $0x128] sm:$0xff]
  %v411 = vld [vmem:[%s6 + $0x130] sm:$0xff]
  %v412 = vld [vmem:[%s6 + $0x138] sm:$0xff]
  %v413 = vld [vmem:[%s6 + $0x140] sm:$0xff]
  %v414 = vld [vmem:[%s6 + $0x148] sm:$0xff]
  %v415 = vld [vmem:[%s6 + $0x150] sm:$0xff]
  %v416 = vld [vmem:[%s6 + $0x158] sm:$0xff]
  %v417 = vld [vmem:[%s6 + $0x160] sm:$0xff]
  %v418 = vld [vmem:[%s6 + $0x168] sm:$0xff]
  %v419 = vld [vmem:[%s6 + $0x170] sm:$0xff]
  %v420 = vld [vmem:[%s6 + $0x178] sm:$0xff]
  %v421 = vld [vmem:[%s6 + $0x180] sm:$0xff]
  %v422 = vld [vmem:[%s6 + $0x188] sm:$0xff]
  %v423 = vld [vmem:[%s6 + $0x190] sm:$0xff]
  %v424 = vld [vmem:[%s6 + $0x198] sm:$0xff]
  %v425 = vld [vmem:[%s6 + $0x1a0] sm:$0xff]
  %v426 = vld [vmem:[%s6 + $0x1a8] sm:$0xff]
  %v427 = vld [vmem:[%s6 + $0x1b0] sm:$0xff]
  %v428 = vld [vmem:[%s6 + $0x1b8] sm:$0xff]
  %v430 = vsel %vm338, %v372, 0
  %432 = vmatprep.subr.mxu0 %v404
  %433 = vmatpush1.msra.mxu0 %v403
  %434 = vmatprep.subr.mxu0 %v402
  %435 = vmatpush1.msra.mxu0 %v401
  %436 = vmatprep.subr.mxu0 %v400
  %437 = vmatpush1.msra.mxu0 %v399
  %438 = vmatprep.subr.mxu0 %v398
  %439 = vmatpush1.msra.mxu0 %v397
  %440 = vmatprep.subr.mxu0 %v396
  %441 = vmatpush1.msra.mxu0 %v395
  %442 = vmatprep.subr.mxu0 %v394
  %443 = vmatpush1.msra.mxu0 %v393
  %444 = vmatprep.subr.mxu0 %v392
  %445 = vmatpush1.msra.mxu0 %v391
  %446 = vmatprep.subr.mxu0 %v390
  %447 = vmatpush1.msra.mxu0 %v389
  %448 = vmatprep.subr.mxu0 %v388
  %449 = vmatpush1.msra.mxu0 %v387
  %450 = vmatprep.subr.mxu0 %v386
  %451 = vmatpush1.msra.mxu0 %v385
  %452 = vmatprep.subr.mxu0 %v384
  %453 = vmatpush1.msra.mxu0 %v383
  %454 = vmatprep.subr.mxu0 %v382
  %455 = vmatpush1.msra.mxu0 %v381
  %456 = vmatprep.subr.mxu0 %v380
  %457 = vmatpush1.msra.mxu0 %v379
  %458 = vmatprep.subr.mxu0 %v378
  %459 = vmatpush1.msra.mxu0 %v377
  %460 = vmatprep.subr.mxu0 %v376
  %461 = vmatpush1.msra.mxu0 %v375
  %462 = vmatprep.subr.mxu0 %v374
  %463 = vmatpush1.msra.mxu0 %v373
  %464 = vmatprep.subr.mxu0 0.0
  %465 = vmatpush2.msra.mxu0 0.0
  %466 = vmatprep.subr.mxu0 0.0
  %467 = vmatpush2.msra.mxu0 0.0
  %468 = vmatprep.subr.mxu0 0.0
  %469 = vmatpush2.msra.mxu0 0.0
  %470 = vmatprep.subr.mxu0 0.0
  %471 = vmatpush2.msra.mxu0 0.0
  %472 = vmatprep.subr.mxu0 %v428
  %473 = vmatpush2.msra.mxu0 %v427
  %474 = vmatprep.subr.mxu0 %v426
  %475 = vmatpush2.msra.mxu0 %v425
  %476 = vmatprep.subr.mxu0 %v424
  %477 = vmatpush2.msra.mxu0 %v423
  %478 = vmatprep.subr.mxu0 %v422
  %479 = vmatpush2.msra.mxu0 %v421
  %480 = vmatprep.subr.mxu0 %v420
  %481 = vmatpush2.msra.mxu0 %v419
  %482 = vmatprep.subr.mxu0 %v418
  %483 = vmatpush2.msra.mxu0 %v417
  %484 = vmatprep.subr.mxu0 %v416
  %485 = vmatpush2.msra.mxu0 %v415
  %486 = vmatprep.subr.mxu0 %v414
  %487 = vmatpush2.msra.mxu0 %v413
  %488 = vmatprep.subr.mxu0 %v412
  %489 = vmatpush2.msra.mxu0 %v411
  %490 = vmatprep.subr.mxu0 %v410
  %491 = vmatpush2.msra.mxu0 %v409
  %492 = vmatprep.subr.mxu0 %v408
  %493 = vmatpush2.msra.mxu0 %v407
  %494 = vmatprep.subr.mxu0 %v406
  %495 = vmatpush2.msra.mxu0 %v405
  %496 = vmatprep.mubr.f32.mxu0 %v430
  %497 = vmatmul.mubr.f32.gmra.mxu0 %v371
  %v498 = vpop.f32.mrf.mxu0
  %v499 = vadd.f32 0.0, %v498
  %v500 = vpop.f32.mrf.mxu0
  %v501 = vadd.f32 0.0, %v500
  %502 = vdwg.mxu0
  %v503 = vmul.f32 %v499, 0.0025510204
  %v504 = vmul.f32 %v501, 0.0025510204
  %v505 = vmul.f32 %v503, %v503
  %v506 = vmul.f32 %v504, %v504
  %v509 = vrot.slane %v505, 7
  %v510 = vrot.slane %v506, 7
  %v513 = vsub.f32 %v503, %v509
  %v514 = vsub.f32 %v504, %v510
  %v515 = vlaneseq
  %v516 = vshrl.u32 %v515, 7
  %v517 = vsub.s32 0, %v516
  %v518 = vrot.slane %v503, %v517
  %v519 = vlaneseq
  %v520 = vshrl.u32 %v519, 7
  %v521 = vsub.s32 0, %v520
  %v522 = vrot.slane %v504, %v521
  %v523 = vsub.f32 %v324, %v518
  %v524 = vsub.f32 %v325, %v522
  %v525 = vsub.f32 %v326, %v518
  %v526 = vsub.f32 %v327, %v522
  %v527 = vadd.f32 %v513, 1e-05
  %v528 = vadd.f32 %v514, 1e-05
  %v529 = vrsqrt.pop %v527
  %v530 = vrsqrt.pop %v528
  %v532 = vlaneseq
  %v533 = vshrl.u32 %v532, 7
  %v534 = vsub.s32 0, %v533
  %v535 = vrot.slane %v328, %v534
  %v536 = vlaneseq
  %v537 = vshrl.u32 %v536, 7
  %v538 = vsub.s32 1, %v537
  %v539 = vrot.slane %v328, %v538
  %v542 = vmul.f32 %v529, %v535
  %v543 = vmul.f32 %v530, %v539
  %v544 = vlaneseq
  %v545 = vshrl.u32 %v544, 7
  %v546 = vsub.s32 1, %v545
  %v547 = vrot.slane %v542, %v546
  %v548 = vlaneseq
  %v549 = vshrl.u32 %v548, 7
  %v550 = vsub.s32 1, %v549
  %v551 = vrot.slane %v543, %v550
  %v552 = vmul.f32 %v523, %v547
  %v553 = vmul.f32 %v524, %v551
  %v554 = vmul.f32 %v525, %v547
  %v555 = vmul.f32 %v526, %v551
  %v557 = vlaneseq
  %v558 = vshrl.u32 %v557, 7
  %v559 = vsub.s32 0, %v558
  %v560 = vrot.slane %v329, %v559
  %v561 = vlaneseq
  %v562 = vshrl.u32 %v561, 7
  %v563 = vsub.s32 1, %v562
  %v564 = vrot.slane %v329, %v563
  %v567 = vadd.f32 %v552, %v560
  %v568 = vadd.f32 %v553, %v564
  %v569 = vadd.f32 %v554, %v560
  %v570 = vadd.f32 %v555, %v564
  %v575 = vrot.slane %v567, 7
  %v576 = vrot.slane %v568, 7
  %v577 = vrot.slane %v569, 7
  %v578 = vsel %vm370, %v575, %v577
  %v579 = vrot.slane %v570, 7
  %v580 = vsel %vm370, %v576, %v579
  %v585 = vrot.slane %v569, 6
  %v586 = vrot.slane %v570, 6
  %v589 = vsel %vm370, %v567, %v575
  %v590 = vsel %vm370, %v568, %v576
  %v591 = vsel %vm51, %v578, %v585
  %v592 = vsel %vm51, %v580, %v586
  %v593 = vld [vmem:[%s10] sm:$0x3]
  %v598 = vrot.slane %v589, 1
  %v599 = vrot.slane %v591, 1
  %v600 = vsel %vm51, %v598, %v599
  %v601 = vrot.slane %v590, 1
  %v602 = vrot.slane %v592, 1
  %v603 = vsel %vm51, %v601, %v602
  %604 = vrot.lane.b32.xlu0 %v600, 96
  %v605 = vpop.permute.xlu0 %604
  %606 = vrot.lane.b32.xlu0 %v603, 96
  %v607 = vpop.permute.xlu0 %606
  %608 = vrot.lane.b32.xlu0 %v599, 96
  %v609 = vpop.permute.xlu0 %608
  %610 = vrot.lane.b32.xlu0 %v602, 96
  %v611 = vpop.permute.xlu0 %610
  %v612 = vsel %vm338, %v605, %v607
  %v613 = vsel %vm338, %v609, %v611
  %v620 = vrot.slane %v589, 2
  %v621 = vrot.slane %v591, 2
  %v622 = vsel %vm57, %v620, %v621
  %v623 = vrot.slane %v590, 2
  %v624 = vrot.slane %v592, 2
  %v625 = vsel %vm57, %v623, %v624
  %626 = vrot.lane.b32.xlu0 %v622, 64
  %v627 = vpop.permute.xlu0 %626
  %628 = vrot.lane.b32.xlu0 %v625, 64
  %v629 = vpop.permute.xlu0 %628
  %630 = vrot.lane.b32.xlu0 %v621, 64
  %v631 = vpop.permute.xlu0 %630
  %632 = vrot.lane.b32.xlu0 %v624, 64
  %v633 = vpop.permute.xlu0 %632
  %vm634 = vcmask 523264
  %v635 = vsel %vm634, %v627, %v629
  %v636 = vsel %vm634, %v631, %v633
  %v641 = vsel %vm338, %v590, %v605
  %v642 = vsel %vm338, %v592, %v609
  %v643 = vsel %vm634, %v607, %v627
  %v644 = vsel %vm634, %v611, %v631
  %v645 = vld [vmem:[%s2] sm:$0xff]
  %v646 = vld [vmem:[%s2 + $0x8] sm:$0xff]
  %v647 = vld [vmem:[%s2 + $0x10] sm:$0xff]
  %v648 = vld [vmem:[%s2 + $0x18] sm:$0xff]
  %v649 = vld [vmem:[%s2 + $0x20] sm:$0xff]
  %v650 = vld [vmem:[%s2 + $0x28] sm:$0xff]
  %v651 = vld [vmem:[%s2 + $0x30] sm:$0xff]
  %v652 = vld [vmem:[%s2 + $0x38] sm:$0xff]
  %v653 = vld [vmem:[%s2 + $0x40] sm:$0xff]
  %v654 = vld [vmem:[%s2 + $0x48] sm:$0xff]
  %v655 = vld [vmem:[%s2 + $0x50] sm:$0xff]
  %v656 = vld [vmem:[%s2 + $0x58] sm:$0xff]
  %v657 = vld [vmem:[%s2 + $0x60] sm:$0xff]
  %v658 = vld [vmem:[%s2 + $0x68] sm:$0xff]
  %v659 = vld [vmem:[%s2 + $0x70] sm:$0xff]
  %v660 = vld [vmem:[%s2 + $0x78] sm:$0xff]
  %v661 = vld [vmem:[%s2 + $0x80] sm:$0xff]
  %v662 = vld [vmem:[%s2 + $0x88] sm:$0xff]
  %v663 = vld [vmem:[%s2 + $0x90] sm:$0xff]
  %v664 = vld [vmem:[%s2 + $0x98] sm:$0xff]
  %v665 = vld [vmem:[%s2 + $0xa0] sm:$0xff]
  %v666 = vld [vmem:[%s2 + $0xa8] sm:$0xff]
  %v667 = vld [vmem:[%s2 + $0xb0] sm:$0xff]
  %v668 = vld [vmem:[%s2 + $0xb8] sm:$0xff]
  %v669 = vld [vmem:[%s2 + $0xc0] sm:$0xff]
  %v670 = vld [vmem:[%s2 + $0xc8] sm:$0xff]
  %v671 = vld [vmem:[%s2 + $0xd0] sm:$0xff]
  %v672 = vld [vmem:[%s2 + $0xd8] sm:$0xff]
  %v673 = vld [vmem:[%s2 + $0xe0] sm:$0xff]
  %v674 = vld [vmem:[%s2 + $0xe8] sm:$0xff]
  %v675 = vld [vmem:[%s2 + $0xf0] sm:$0xff]
  %v676 = vld [vmem:[%s2 + $0xf8] sm:$0xff]
  %v677 = vld [vmem:[%s2 + $0x100] sm:$0xff]
  %v678 = vld [vmem:[%s2 + $0x108] sm:$0xff]
  %v679 = vld [vmem:[%s2 + $0x110] sm:$0xff]
  %v680 = vld [vmem:[%s2 + $0x118] sm:$0xff]
  %v681 = vld [vmem:[%s2 + $0x120] sm:$0xff]
  %v682 = vld [vmem:[%s2 + $0x128] sm:$0xff]
  %v683 = vld [vmem:[%s2 + $0x130] sm:$0xff]
  %v684 = vld [vmem:[%s2 + $0x138] sm:$0xff]
  %v685 = vld [vmem:[%s2 + $0x140] sm:$0xff]
  %v686 = vld [vmem:[%s2 + $0x148] sm:$0xff]
  %v687 = vld [vmem:[%s2 + $0x150] sm:$0xff]
  %v688 = vld [vmem:[%s2 + $0x158] sm:$0xff]
  %v689 = vld [vmem:[%s2 + $0x160] sm:$0xff]
  %v690 = vld [vmem:[%s2 + $0x168] sm:$0xff]
  %v691 = vld [vmem:[%s2 + $0x170] sm:$0xff]
  %v692 = vld [vmem:[%s2 + $0x178] sm:$0xff]
  %v693 = vld [vmem:[%s2 + $0x180] sm:$0xff]
  %v694 = vld [vmem:[%s2 + $0x188] sm:$0xff]
  %v695 = vld [vmem:[%s2 + $0x190] sm:$0xff]
  %v696 = vld [vmem:[%s2 + $0x198] sm:$0xff]
  %v697 = vld [vmem:[%s2 + $0x1a0] sm:$0xff]
  %v698 = vld [vmem:[%s2 + $0x1a8] sm:$0xff]
  %v699 = vld [vmem:[%s2 + $0x1b0] sm:$0xff]
  %v700 = vld [vmem:[%s2 + $0x1b8] sm:$0xff]
  %v701 = vld [vmem:[%s2 + $0x1c0] sm:$0xff]
  %v702 = vld [vmem:[%s2 + $0x1c8] sm:$0xff]
  %v703 = vld [vmem:[%s2 + $0x1d0] sm:$0xff]
  %v704 = vld [vmem:[%s2 + $0x1d8] sm:$0xff]
  %v705 = vld [vmem:[%s2 + $0x1e0] sm:$0xff]
  %v706 = vld [vmem:[%s2 + $0x1e8] sm:$0xff]
  %v707 = vld [vmem:[%s2 + $0x1f0] sm:$0xff]
  %v708 = vld [vmem:[%s2 + $0x1f8] sm:$0xff]
  %v709 = vld [vmem:[%s2 + $0x200] sm:$0xff]
  %v710 = vld [vmem:[%s2 + $0x208] sm:$0xff]
  %v711 = vld [vmem:[%s2 + $0x210] sm:$0xff]
  %v712 = vld [vmem:[%s2 + $0x218] sm:$0xff]
  %v713 = vld [vmem:[%s2 + $0x220] sm:$0xff]
  %v714 = vld [vmem:[%s2 + $0x228] sm:$0xff]
  %v715 = vld [vmem:[%s2 + $0x230] sm:$0xff]
  %v716 = vld [vmem:[%s2 + $0x238] sm:$0xff]
  %v717 = vld [vmem:[%s2 + $0x240] sm:$0xff]
  %v718 = vld [vmem:[%s2 + $0x248] sm:$0xff]
  %v719 = vld [vmem:[%s2 + $0x250] sm:$0xff]
  %v720 = vld [vmem:[%s2 + $0x258] sm:$0xff]
  %v721 = vld [vmem:[%s2 + $0x260] sm:$0xff]
  %v722 = vld [vmem:[%s2 + $0x268] sm:$0xff]
  %v723 = vld [vmem:[%s2 + $0x270] sm:$0xff]
  %v724 = vld [vmem:[%s2 + $0x278] sm:$0xff]
  %v725 = vld [vmem:[%s2 + $0x280] sm:$0xff]
  %v726 = vld [vmem:[%s2 + $0x288] sm:$0xff]
  %v727 = vld [vmem:[%s2 + $0x290] sm:$0xff]
  %v728 = vld [vmem:[%s2 + $0x298] sm:$0xff]
  %v729 = vld [vmem:[%s2 + $0x2a0] sm:$0xff]
  %v730 = vld [vmem:[%s2 + $0x2a8] sm:$0xff]
  %v731 = vld [vmem:[%s2 + $0x2b0] sm:$0xff]
  %v732 = vld [vmem:[%s2 + $0x2b8] sm:$0xff]
  %v733 = vld [vmem:[%s2 + $0x2c0] sm:$0xff]
  %v734 = vld [vmem:[%s2 + $0x2c8] sm:$0xff]
  %v735 = vld [vmem:[%s2 + $0x2d0] sm:$0xff]
  %v736 = vld [vmem:[%s2 + $0x2d8] sm:$0xff]
  %v737 = vld [vmem:[%s2 + $0x2e0] sm:$0xff]
  %v738 = vld [vmem:[%s2 + $0x2e8] sm:$0xff]
  %v739 = vld [vmem:[%s2 + $0x2f0] sm:$0xff]
  %v740 = vld [vmem:[%s2 + $0x2f8] sm:$0xff]
  %v741 = vld [vmem:[%s2 + $0x300] sm:$0xff]
  %v742 = vld [vmem:[%s2 + $0x308] sm:$0xff]
  %v743 = vld [vmem:[%s2 + $0x310] sm:$0xff]
  %v744 = vld [vmem:[%s2 + $0x318] sm:$0xff]
  %v745 = vld [vmem:[%s2 + $0x320] sm:$0xff]
  %v746 = vld [vmem:[%s2 + $0x328] sm:$0xff]
  %v747 = vld [vmem:[%s2 + $0x330] sm:$0xff]
  %v748 = vld [vmem:[%s2 + $0x338] sm:$0xff]
  %v749 = vld [vmem:[%s2 + $0x340] sm:$0xff]
  %v750 = vld [vmem:[%s2 + $0x348] sm:$0xff]
  %v751 = vld [vmem:[%s2 + $0x350] sm:$0xff]
  %v752 = vld [vmem:[%s2 + $0x358] sm:$0xff]
  %v753 = vld [vmem:[%s2 + $0x360] sm:$0xff]
  %v754 = vld [vmem:[%s2 + $0x368] sm:$0xff]
  %v755 = vld [vmem:[%s2 + $0x370] sm:$0xff]
  %v756 = vld [vmem:[%s2 + $0x378] sm:$0xff]
  %v757 = vld [vmem:[%s2 + $0x380] sm:$0xff]
  %v758 = vld [vmem:[%s2 + $0x388] sm:$0xff]
  %v759 = vld [vmem:[%s2 + $0x390] sm:$0xff]
  %v760 = vld [vmem:[%s2 + $0x398] sm:$0xff]
  %v761 = vld [vmem:[%s2 + $0x3a0] sm:$0xff]
  %v762 = vld [vmem:[%s2 + $0x3a8] sm:$0xff]
  %v763 = vld [vmem:[%s2 + $0x3b0] sm:$0xff]
  %v764 = vld [vmem:[%s2 + $0x3b8] sm:$0xff]
  %v765 = vld [vmem:[%s2 + $0x3c0] sm:$0xff]
  %v766 = vld [vmem:[%s2 + $0x3c8] sm:$0xff]
  %v767 = vld [vmem:[%s2 + $0x3d0] sm:$0xff]
  %v768 = vld [vmem:[%s2 + $0x3d8] sm:$0xff]
  %v769 = vld [vmem:[%s2 + $0x3e0] sm:$0xff]
  %v770 = vld [vmem:[%s2 + $0x3e8] sm:$0xff]
  %v771 = vld [vmem:[%s2 + $0x3f0] sm:$0xff]
  %v772 = vld [vmem:[%s2 + $0x3f8] sm:$0xff]
  %v773 = vld [vmem:[%s2 + $0x400] sm:$0xff]
  %v774 = vld [vmem:[%s2 + $0x408] sm:$0xff]
  %v775 = vld [vmem:[%s2 + $0x410] sm:$0xff]
  %v776 = vld [vmem:[%s2 + $0x418] sm:$0xff]
  %v777 = vld [vmem:[%s2 + $0x420] sm:$0xff]
  %v778 = vld [vmem:[%s2 + $0x428] sm:$0xff]
  %v779 = vld [vmem:[%s2 + $0x430] sm:$0xff]
  %v780 = vld [vmem:[%s2 + $0x438] sm:$0xff]
  %v781 = vld [vmem:[%s2 + $0x440] sm:$0xff]
  %v782 = vld [vmem:[%s2 + $0x448] sm:$0xff]
  %v783 = vld [vmem:[%s2 + $0x450] sm:$0xff]
  %v784 = vld [vmem:[%s2 + $0x458] sm:$0xff]
  %v785 = vld [vmem:[%s2 + $0x460] sm:$0xff]
  %v786 = vld [vmem:[%s2 + $0x468] sm:$0xff]
  %v787 = vld [vmem:[%s2 + $0x470] sm:$0xff]
  %v788 = vld [vmem:[%s2 + $0x478] sm:$0xff]
  %v789 = vld [vmem:[%s2 + $0x480] sm:$0xff]
  %v790 = vld [vmem:[%s2 + $0x488] sm:$0xff]
  %v791 = vld [vmem:[%s2 + $0x490] sm:$0xff]
  %v792 = vld [vmem:[%s2 + $0x498] sm:$0xff]
  %v793 = vld [vmem:[%s2 + $0x4a0] sm:$0xff]
  %v794 = vld [vmem:[%s2 + $0x4a8] sm:$0xff]
  %v795 = vld [vmem:[%s2 + $0x4b0] sm:$0xff]
  %v796 = vld [vmem:[%s2 + $0x4b8] sm:$0xff]
  %v797 = vld [vmem:[%s2 + $0x4c0] sm:$0xff]
  %v798 = vld [vmem:[%s2 + $0x4c8] sm:$0xff]
  %v799 = vld [vmem:[%s2 + $0x4d0] sm:$0xff]
  %v800 = vld [vmem:[%s2 + $0x4d8] sm:$0xff]
  %v801 = vld [vmem:[%s2 + $0x4e0] sm:$0xff]
  %v802 = vld [vmem:[%s2 + $0x4e8] sm:$0xff]
  %v803 = vld [vmem:[%s2 + $0x4f0] sm:$0xff]
  %v804 = vld [vmem:[%s2 + $0x4f8] sm:$0xff]
  %v805 = vld [vmem:[%s2 + $0x500] sm:$0xff]
  %v806 = vld [vmem:[%s2 + $0x508] sm:$0xff]
  %v807 = vld [vmem:[%s2 + $0x510] sm:$0xff]
  %v808 = vld [vmem:[%s2 + $0x518] sm:$0xff]
  %v809 = vld [vmem:[%s2 + $0x520] sm:$0xff]
  %v810 = vld [vmem:[%s2 + $0x528] sm:$0xff]
  %v811 = vld [vmem:[%s2 + $0x530] sm:$0xff]
  %v812 = vld [vmem:[%s2 + $0x538] sm:$0xff]
  %v814 = vlaneseq
  %v815 = vshrl.u32 %v814, 7
  %v816 = vsub.s32 0, %v815
  %v817 = vrot.slane %v593, %v816
  %v818 = vlaneseq
  %v819 = vshrl.u32 %v818, 7
  %v820 = vsub.s32 1, %v819
  %v821 = vrot.slane %v593, %v820
  %vm824 = vcmask 261120
  %v825 = vsel %vm824, %v629, 0
  %v827 = vsel %vm824, %v633, 0
  %829 = vmatprep.subr.mxu0 %v676
  %830 = vmatpush1.msra.mxu0 %v675
  %831 = vmatprep.subr.mxu0 %v674
  %832 = vmatpush1.msra.mxu0 %v673
  %833 = vmatprep.subr.mxu0 %v672
  %834 = vmatpush1.msra.mxu0 %v671
  %835 = vmatprep.subr.mxu0 %v670
  %836 = vmatpush1.msra.mxu0 %v669
  %837 = vmatprep.subr.mxu0 %v668
  %838 = vmatpush1.msra.mxu0 %v667
  %839 = vmatprep.subr.mxu0 %v666
  %840 = vmatpush1.msra.mxu0 %v665
  %841 = vmatprep.subr.mxu0 %v664
  %842 = vmatpush1.msra.mxu0 %v663
  %843 = vmatprep.subr.mxu0 %v662
  %844 = vmatpush1.msra.mxu0 %v661
  %845 = vmatprep.subr.mxu0 %v660
  %846 = vmatpush1.msra.mxu0 %v659
  %847 = vmatprep.subr.mxu0 %v658
  %848 = vmatpush1.msra.mxu0 %v657
  %849 = vmatprep.subr.mxu0 %v656
  %850 = vmatpush1.msra.mxu0 %v655
  %851 = vmatprep.subr.mxu0 %v654
  %852 = vmatpush1.msra.mxu0 %v653
  %853 = vmatprep.subr.mxu0 %v652
  %854 = vmatpush1.msra.mxu0 %v651
  %855 = vmatprep.subr.mxu0 %v650
  %856 = vmatpush1.msra.mxu0 %v649
  %857 = vmatprep.subr.mxu0 %v648
  %858 = vmatpush1.msra.mxu0 %v647
  %859 = vmatprep.subr.mxu0 %v646
  %860 = vmatpush1.msra.mxu0 %v645
  %861 = vmatprep.subr.mxu0 %v708
  %862 = vmatpush2.msra.mxu0 %v707
  %863 = vmatprep.subr.mxu0 %v706
  %864 = vmatpush2.msra.mxu0 %v705
  %865 = vmatprep.subr.mxu0 %v704
  %866 = vmatpush2.msra.mxu0 %v703
  %867 = vmatprep.subr.mxu0 %v702
  %868 = vmatpush2.msra.mxu0 %v701
  %869 = vmatprep.subr.mxu0 %v700
  %870 = vmatpush2.msra.mxu0 %v699
  %871 = vmatprep.subr.mxu0 %v698
  %872 = vmatpush2.msra.mxu0 %v697
  %873 = vmatprep.subr.mxu0 %v696
  %874 = vmatpush2.msra.mxu0 %v695
  %875 = vmatprep.subr.mxu0 %v694
  %876 = vmatpush2.msra.mxu0 %v693
  %877 = vmatprep.subr.mxu0 %v692
  %878 = vmatpush2.msra.mxu0 %v691
  %879 = vmatprep.subr.mxu0 %v690
  %880 = vmatpush2.msra.mxu0 %v689
  %881 = vmatprep.subr.mxu0 %v688
  %882 = vmatpush2.msra.mxu0 %v687
  %883 = vmatprep.subr.mxu0 %v686
  %884 = vmatpush2.msra.mxu0 %v685
  %885 = vmatprep.subr.mxu0 %v684
  %886 = vmatpush2.msra.mxu0 %v683
  %887 = vmatprep.subr.mxu0 %v682
  %888 = vmatpush2.msra.mxu0 %v681
  %889 = vmatprep.subr.mxu0 %v680
  %890 = vmatpush2.msra.mxu0 %v679
  %891 = vmatprep.subr.mxu0 %v678
  %892 = vmatpush2.msra.mxu0 %v677
  %893 = vmatprep.mubr.f32.mxu0 %v641
  %894 = vmatmul.mubr.f32.gmra.mxu0 %v589
  %v895 = vpop.f32.mrf.mxu0
  %v896 = vadd.f32 %v817, %v895
  %v897 = vpop.f32.mrf.mxu0
  %v898 = vadd.f32 %v821, %v897
  %899 = vmatprep.mubr.f32.mxu0 %v642
  %900 = vmatmul.mubr.f32.gmra.mxu0 %v591
  %v901 = vpop.f32.mrf.mxu0
  %v902 = vadd.f32 %v817, %v901
  %v903 = vpop.f32.mrf.mxu0
  %v904 = vadd.f32 %v821, %v903
  %905 = vdwg.mxu0
  %906 = vmatprep.subr.mxu0 %v740
  %907 = vmatpush1.msra.mxu0 %v739
  %908 = vmatprep.subr.mxu0 %v738
  %909 = vmatpush1.msra.mxu0 %v737
  %910 = vmatprep.subr.mxu0 %v736
  %911 = vmatpush1.msra.mxu0 %v735
  %912 = vmatprep.subr.mxu0 %v734
  %913 = vmatpush1.msra.mxu0 %v733
  %914 = vmatprep.subr.mxu0 %v732
  %915 = vmatpush1.msra.mxu0 %v731
  %916 = vmatprep.subr.mxu0 %v730
  %917 = vmatpush1.msra.mxu0 %v729
  %918 = vmatprep.subr.mxu0 %v728
  %919 = vmatpush1.msra.mxu0 %v727
  %920 = vmatprep.subr.mxu0 %v726
  %921 = vmatpush1.msra.mxu0 %v725
  %922 = vmatprep.subr.mxu0 %v724
  %923 = vmatpush1.msra.mxu0 %v723
  %924 = vmatprep.subr.mxu0 %v722
  %925 = vmatpush1.msra.mxu0 %v721
  %926 = vmatprep.subr.mxu0 %v720
  %927 = vmatpush1.msra.mxu0 %v719
  %928 = vmatprep.subr.mxu0 %v718
  %929 = vmatpush1.msra.mxu0 %v717
  %930 = vmatprep.subr.mxu0 %v716
  %931 = vmatpush1.msra.mxu0 %v715
  %932 = vmatprep.subr.mxu0 %v714
  %933 = vmatpush1.msra.mxu0 %v713
  %934 = vmatprep.subr.mxu0 %v712
  %935 = vmatpush1.msra.mxu0 %v711
  %936 = vmatprep.subr.mxu0 %v710
  %937 = vmatpush1.msra.mxu0 %v709
  %938 = vmatprep.subr.mxu0 %v772
  %939 = vmatpush2.msra.mxu0 %v771
  %940 = vmatprep.subr.mxu0 %v770
  %941 = vmatpush2.msra.mxu0 %v769
  %942 = vmatprep.subr.mxu0 %v768
  %943 = vmatpush2.msra.mxu0 %v767
  %944 = vmatprep.subr.mxu0 %v766
  %945 = vmatpush2.msra.mxu0 %v765
  %946 = vmatprep.subr.mxu0 %v764
  %947 = vmatpush2.msra.mxu0 %v763
  %948 = vmatprep.subr.mxu0 %v762
  %949 = vmatpush2.msra.mxu0 %v761
  %950 = vmatprep.subr.mxu0 %v760
  %951 = vmatpush2.msra.mxu0 %v759
  %952 = vmatprep.subr.mxu0 %v758
  %953 = vmatpush2.msra.mxu0 %v757
  %954 = vmatprep.subr.mxu0 %v756
  %955 = vmatpush2.msra.mxu0 %v755
  %956 = vmatprep.subr.mxu0 %v754
  %957 = vmatpush2.msra.mxu0 %v753
  %958 = vmatprep.subr.mxu0 %v752
  %959 = vmatpush2.msra.mxu0 %v751
  %960 = vmatprep.subr.mxu0 %v750
  %961 = vmatpush2.msra.mxu0 %v749
  %962 = vmatprep.subr.mxu0 %v748
  %963 = vmatpush2.msra.mxu0 %v747
  %964 = vmatprep.subr.mxu0 %v746
  %965 = vmatpush2.msra.mxu0 %v745
  %966 = vmatprep.subr.mxu0 %v744
  %967 = vmatpush2.msra.mxu0 %v743
  %968 = vmatprep.subr.mxu0 %v742
  %969 = vmatpush2.msra.mxu0 %v741
  %970 = vmatprep.mubr.f32.mxu0 %v643
  %971 = vmatmul.mubr.f32.gmra.mxu0 %v612
  %v972 = vpop.f32.mrf.mxu0
  %v973 = vadd.f32 %v896, %v972
  %v974 = vpop.f32.mrf.mxu0
  %v975 = vadd.f32 %v898, %v974
  %976 = vmatprep.mubr.f32.mxu0 %v644
  %977 = vmatmul.mubr.f32.gmra.mxu0 %v613
  %v978 = vpop.f32.mrf.mxu0
  %v979 = vadd.f32 %v902, %v978
  %v980 = vpop.f32.mrf.mxu0
  %v981 = vadd.f32 %v904, %v980
  %982 = vdwg.mxu0
  %983 = vmatprep.subr.mxu0 %v804
  %984 = vmatpush1.msra.mxu0 %v803
  %985 = vmatprep.subr.mxu0 %v802
  %986 = vmatpush1.msra.mxu0 %v801
  %987 = vmatprep.subr.mxu0 %v800
  %988 = vmatpush1.msra.mxu0 %v799
  %989 = vmatprep.subr.mxu0 %v798
  %990 = vmatpush1.msra.mxu0 %v797
  %991 = vmatprep.subr.mxu0 %v796
  %992 = vmatpush1.msra.mxu0 %v795
  %993 = vmatprep.subr.mxu0 %v794
  %994 = vmatpush1.msra.mxu0 %v793
  %995 = vmatprep.subr.mxu0 %v792
  %996 = vmatpush1.msra.mxu0 %v791
  %997 = vmatprep.subr.mxu0 %v790
  %998 = vmatpush1.msra.mxu0 %v789
  %999 = vmatprep.subr.mxu0 %v788
  %1000 = vmatpush1.msra.mxu0 %v787
  %1001 = vmatprep.subr.mxu0 %v786
  %1002 = vmatpush1.msra.mxu0 %v785
  %1003 = vmatprep.subr.mxu0 %v784
  %1004 = vmatpush1.msra.mxu0 %v783
  %1005 = vmatprep.subr.mxu0 %v782
  %1006 = vmatpush1.msra.mxu0 %v781
  %1007 = vmatprep.subr.mxu0 %v780
  %1008 = vmatpush1.msra.mxu0 %v779
  %1009 = vmatprep.subr.mxu0 %v778
  %1010 = vmatpush1.msra.mxu0 %v777
  %1011 = vmatprep.subr.mxu0 %v776
  %1012 = vmatpush1.msra.mxu0 %v775
  %1013 = vmatprep.subr.mxu0 %v774
  %1014 = vmatpush1.msra.mxu0 %v773
  %1015 = vmatprep.subr.mxu0 0.0
  %1016 = vmatpush2.msra.mxu0 0.0
  %1017 = vmatprep.subr.mxu0 0.0
  %1018 = vmatpush2.msra.mxu0 0.0
  %1019 = vmatprep.subr.mxu0 0.0
  %1020 = vmatpush2.msra.mxu0 0.0
  %1021 = vmatprep.subr.mxu0 0.0
  %1022 = vmatpush2.msra.mxu0 0.0
  %1023 = vmatprep.subr.mxu0 0.0
  %1024 = vmatpush2.msra.mxu0 0.0
  %1025 = vmatprep.subr.mxu0 0.0
  %1026 = vmatpush2.msra.mxu0 0.0
  %1027 = vmatprep.subr.mxu0 0.0
  %1028 = vmatpush2.msra.mxu0 0.0
  %1029 = vmatprep.subr.mxu0 0.0
  %1030 = vmatpush2.msra.mxu0 0.0
  %1031 = vmatprep.subr.mxu0 0.0
  %1032 = vmatpush2.msra.mxu0 0.0
  %1033 = vmatprep.subr.mxu0 0.0
  %1034 = vmatpush2.msra.mxu0 0.0
  %1035 = vmatprep.subr.mxu0 0.0
  %1036 = vmatpush2.msra.mxu0 0.0
  %1037 = vmatprep.subr.mxu0 0.0
  %1038 = vmatpush2.msra.mxu0 0.0
  %1039 = vmatprep.subr.mxu0 %v812
  %1040 = vmatpush2.msra.mxu0 %v811
  %1041 = vmatprep.subr.mxu0 %v810
  %1042 = vmatpush2.msra.mxu0 %v809
  %1043 = vmatprep.subr.mxu0 %v808
  %1044 = vmatpush2.msra.mxu0 %v807
  %1045 = vmatprep.subr.mxu0 %v806
  %1046 = vmatpush2.msra.mxu0 %v805
  %1047 = vmatprep.mubr.f32.mxu0 %v825
  %1048 = vmatmul.mubr.f32.gmra.mxu0 %v635
  %v1049 = vpop.f32.mrf.mxu0
  %v1050 = vadd.f32 %v973, %v1049
  %v1051 = vpop.f32.mrf.mxu0
  %v1052 = vadd.f32 %v975, %v1051
  %1053 = vmatprep.mubr.f32.mxu0 %v827
  %1054 = vmatmul.mubr.f32.gmra.mxu0 %v636
  %v1055 = vpop.f32.mrf.mxu0
  %v1056 = vadd.f32 %v979, %v1055
  %v1057 = vpop.f32.mrf.mxu0
  %v1058 = vadd.f32 %v981, %v1057
  %1059 = vdwg.mxu0
  %v1060 = vmax.f32 %v1050, 0.0
  %v1061 = vmax.f32 %v1052, 0.0
  %v1062 = vmax.f32 %v1056, 0.0
  %v1063 = vmax.f32 %v1058, 0.0
  %v1064 = vld [vmem:[%s11] sm:$0x3]
  %v1065 = vld [vmem:[%s12] sm:$0x3]
  %v1066 = vsel %vm57, %v1062, 0.0
  %v1067 = vadd.f32 %v1060, %v1066
  %v1068 = vrot.slane %v1067, 4
  %v1069 = vadd.f32 %v1067, %v1068
  %v1070 = vrot.slane %v1069, 2
  %v1071 = vadd.f32 %v1069, %v1070
  %v1072 = vrot.slane %v1071, 1
  %v1073 = vadd.f32 %v1071, %v1072
  %v1074 = vsel %vm338, %v1061, 0.0
  %v1075 = vsel %vm340, %v1063, 0.0
  %v1076 = vadd.f32 %v1074, %v1075
  %v1077 = vrot.slane %v1076, 4
  %v1078 = vadd.f32 %v1076, %v1077
  %v1079 = vrot.slane %v1078, 2
  %v1080 = vadd.f32 %v1078, %v1079
  %v1081 = vrot.slane %v1080, 1
  %v1082 = vadd.f32 %v1080, %v1081
  %v1083 = vmul.f32 %v1060, %v1060
  %v1084 = vmul.f32 %v1061, %v1061
  %v1085 = vmul.f32 %v1062, %v1062
  %v1086 = vmul.f32 %v1063, %v1063
  %v1087 = vsel %vm57, %v1085, 0.0
  %v1088 = vadd.f32 %v1083, %v1087
  %v1089 = vrot.slane %v1088, 4
  %v1090 = vadd.f32 %v1088, %v1089
  %v1091 = vrot.slane %v1090, 2
  %v1092 = vadd.f32 %v1090, %v1091
  %v1093 = vrot.slane %v1092, 1
  %v1094 = vadd.f32 %v1092, %v1093
  %v1095 = vsel %vm338, %v1084, 0.0
  %v1096 = vsel %vm340, %v1086, 0.0
  %v1097 = vadd.f32 %v1095, %v1096
  %v1098 = vrot.slane %v1097, 4
  %v1099 = vadd.f32 %v1097, %v1098
  %v1100 = vrot.slane %v1099, 2
  %v1101 = vadd.f32 %v1099, %v1100
  %v1102 = vrot.slane %v1101, 1
  %v1103 = vadd.f32 %v1101, %v1102
  %v1104 = vsel %vm370, %v1073, %v1094
  %v1105 = vsel %vm370, %v1082, %v1103
  %v1107 = vsel %vm338, %v1105, 0
  %1109 = vmatprep.subr.mxu0 %v404
  %1110 = vmatpush1.msra.mxu0 %v403
  %1111 = vmatprep.subr.mxu0 %v402
  %1112 = vmatpush1.msra.mxu0 %v401
  %1113 = vmatprep.subr.mxu0 %v400
  %1114 = vmatpush1.msra.mxu0 %v399
  %1115 = vmatprep.subr.mxu0 %v398
  %1116 = vmatpush1.msra.mxu0 %v397
  %1117 = vmatprep.subr.mxu0 %v396
  %1118 = vmatpush1.msra.mxu0 %v395
  %1119 = vmatprep.subr.mxu0 %v394
  %1120 = vmatpush1.msra.mxu0 %v393
  %1121 = vmatprep.subr.mxu0 %v392
  %1122 = vmatpush1.msra.mxu0 %v391
  %1123 = vmatprep.subr.mxu0 %v390
  %1124 = vmatpush1.msra.mxu0 %v389
  %1125 = vmatprep.subr.mxu0 %v388
  %1126 = vmatpush1.msra.mxu0 %v387
  %1127 = vmatprep.subr.mxu0 %v386
  %1128 = vmatpush1.msra.mxu0 %v385
  %1129 = vmatprep.subr.mxu0 %v384
  %1130 = vmatpush1.msra.mxu0 %v383
  %1131 = vmatprep.subr.mxu0 %v382
  %1132 = vmatpush1.msra.mxu0 %v381
  %1133 = vmatprep.subr.mxu0 %v380
  %1134 = vmatpush1.msra.mxu0 %v379
  %1135 = vmatprep.subr.mxu0 %v378
  %1136 = vmatpush1.msra.mxu0 %v377
  %1137 = vmatprep.subr.mxu0 %v376
  %1138 = vmatpush1.msra.mxu0 %v375
  %1139 = vmatprep.subr.mxu0 %v374
  %1140 = vmatpush1.msra.mxu0 %v373
  %1141 = vmatprep.subr.mxu0 0.0
  %1142 = vmatpush2.msra.mxu0 0.0
  %1143 = vmatprep.subr.mxu0 0.0
  %1144 = vmatpush2.msra.mxu0 0.0
  %1145 = vmatprep.subr.mxu0 0.0
  %1146 = vmatpush2.msra.mxu0 0.0
  %1147 = vmatprep.subr.mxu0 0.0
  %1148 = vmatpush2.msra.mxu0 0.0
  %1149 = vmatprep.subr.mxu0 %v428
  %1150 = vmatpush2.msra.mxu0 %v427
  %1151 = vmatprep.subr.mxu0 %v426
  %1152 = vmatpush2.msra.mxu0 %v425
  %1153 = vmatprep.subr.mxu0 %v424
  %1154 = vmatpush2.msra.mxu0 %v423
  %1155 = vmatprep.subr.mxu0 %v422
  %1156 = vmatpush2.msra.mxu0 %v421
  %1157 = vmatprep.subr.mxu0 %v420
  %1158 = vmatpush2.msra.mxu0 %v419
  %1159 = vmatprep.subr.mxu0 %v418
  %1160 = vmatpush2.msra.mxu0 %v417
  %1161 = vmatprep.subr.mxu0 %v416
  %1162 = vmatpush2.msra.mxu0 %v415
  %1163 = vmatprep.subr.mxu0 %v414
  %1164 = vmatpush2.msra.mxu0 %v413
  %1165 = vmatprep.subr.mxu0 %v412
  %1166 = vmatpush2.msra.mxu0 %v411
  %1167 = vmatprep.subr.mxu0 %v410
  %1168 = vmatpush2.msra.mxu0 %v409
  %1169 = vmatprep.subr.mxu0 %v408
  %1170 = vmatpush2.msra.mxu0 %v407
  %1171 = vmatprep.subr.mxu0 %v406
  %1172 = vmatpush2.msra.mxu0 %v405
  %1173 = vmatprep.mubr.f32.mxu0 %v1107
  %1174 = vmatmul.mubr.f32.gmra.mxu0 %v1104
  %v1175 = vpop.f32.mrf.mxu0
  %v1176 = vadd.f32 0.0, %v1175
  %v1177 = vpop.f32.mrf.mxu0
  %v1178 = vadd.f32 0.0, %v1177
  %1179 = vdwg.mxu0
  %v1180 = vmul.f32 %v1176, 0.0025510204
  %v1181 = vmul.f32 %v1178, 0.0025510204
  %v1182 = vmul.f32 %v1180, %v1180
  %v1183 = vmul.f32 %v1181, %v1181
  %v1186 = vrot.slane %v1182, 7
  %v1187 = vrot.slane %v1183, 7
  %v1190 = vsub.f32 %v1180, %v1186
  %v1191 = vsub.f32 %v1181, %v1187
  %v1192 = vlaneseq
  %v1193 = vshrl.u32 %v1192, 7
  %v1194 = vsub.s32 0, %v1193
  %v1195 = vrot.slane %v1180, %v1194
  %v1196 = vlaneseq
  %v1197 = vshrl.u32 %v1196, 7
  %v1198 = vsub.s32 0, %v1197
  %v1199 = vrot.slane %v1181, %v1198
  %v1200 = vsub.f32 %v1060, %v1195
  %v1201 = vsub.f32 %v1061, %v1199
  %v1202 = vsub.f32 %v1062, %v1195
  %v1203 = vsub.f32 %v1063, %v1199
  %v1204 = vadd.f32 %v1190, 1e-05
  %v1205 = vadd.f32 %v1191, 1e-05
  %v1206 = vrsqrt.pop %v1204
  %v1207 = vrsqrt.pop %v1205
  %v1209 = vlaneseq
  %v1210 = vshrl.u32 %v1209, 7
  %v1211 = vsub.s32 0, %v1210
  %v1212 = vrot.slane %v1064, %v1211
  %v1213 = vlaneseq
  %v1214 = vshrl.u32 %v1213, 7
  %v1215 = vsub.s32 1, %v1214
  %v1216 = vrot.slane %v1064, %v1215
  %v1219 = vmul.f32 %v1206, %v1212
  %v1220 = vmul.f32 %v1207, %v1216
  %v1221 = vlaneseq
  %v1222 = vshrl.u32 %v1221, 7
  %v1223 = vsub.s32 1, %v1222
  %v1224 = vrot.slane %v1219, %v1223
  %v1225 = vlaneseq
  %v1226 = vshrl.u32 %v1225, 7
  %v1227 = vsub.s32 1, %v1226
  %v1228 = vrot.slane %v1220, %v1227
  %v1229 = vmul.f32 %v1200, %v1224
  %v1230 = vmul.f32 %v1201, %v1228
  %v1231 = vmul.f32 %v1202, %v1224
  %v1232 = vmul.f32 %v1203, %v1228
  %v1234 = vlaneseq
  %v1235 = vshrl.u32 %v1234, 7
  %v1236 = vsub.s32 0, %v1235
  %v1237 = vrot.slane %v1065, %v1236
  %v1238 = vlaneseq
  %v1239 = vshrl.u32 %v1238, 7
  %v1240 = vsub.s32 1, %v1239
  %v1241 = vrot.slane %v1065, %v1240
  %v1244 = vadd.f32 %v1229, %v1237
  %v1245 = vadd.f32 %v1230, %v1241
  %v1246 = vadd.f32 %v1231, %v1237
  %v1247 = vadd.f32 %v1232, %v1241
  %v1248 = vld [vmem:[%s3] sm:$0xff]
  %v1249 = vld [vmem:[%s3 + $0x8] sm:$0xff]
  %v1250 = vld [vmem:[%s3 + $0x10] sm:$0xff]
  %v1251 = vld [vmem:[%s3 + $0x18] sm:$0xff]
  %v1252 = vld [vmem:[%s3 + $0x20] sm:$0xff]
  %v1253 = vld [vmem:[%s3 + $0x28] sm:$0xff]
  %v1254 = vld [vmem:[%s3 + $0x30] sm:$0xff]
  %v1255 = vld [vmem:[%s3 + $0x38] sm:$0xff]
  %v1256 = vld [vmem:[%s3 + $0x40] sm:$0xff]
  %v1257 = vld [vmem:[%s3 + $0x48] sm:$0xff]
  %v1258 = vld [vmem:[%s3 + $0x50] sm:$0xff]
  %v1259 = vld [vmem:[%s3 + $0x58] sm:$0xff]
  %v1260 = vld [vmem:[%s3 + $0x60] sm:$0xff]
  %v1261 = vld [vmem:[%s3 + $0x68] sm:$0xff]
  %v1262 = vld [vmem:[%s3 + $0x70] sm:$0xff]
  %v1263 = vld [vmem:[%s3 + $0x78] sm:$0xff]
  %v1264 = vld [vmem:[%s3 + $0x80] sm:$0xff]
  %v1265 = vld [vmem:[%s3 + $0x88] sm:$0xff]
  %v1266 = vld [vmem:[%s3 + $0x90] sm:$0xff]
  %v1267 = vld [vmem:[%s3 + $0x98] sm:$0xff]
  %v1268 = vld [vmem:[%s3 + $0xa0] sm:$0xff]
  %v1269 = vld [vmem:[%s3 + $0xa8] sm:$0xff]
  %v1270 = vld [vmem:[%s3 + $0xb0] sm:$0xff]
  %v1271 = vld [vmem:[%s3 + $0xb8] sm:$0xff]
  %v1272 = vld [vmem:[%s3 + $0xc0] sm:$0xff]
  %v1273 = vld [vmem:[%s3 + $0xc8] sm:$0xff]
  %v1274 = vld [vmem:[%s3 + $0xd0] sm:$0xff]
  %v1275 = vld [vmem:[%s3 + $0xd8] sm:$0xff]
  %v1276 = vld [vmem:[%s3 + $0xe0] sm:$0xff]
  %v1277 = vld [vmem:[%s3 + $0xe8] sm:$0xff]
  %v1278 = vld [vmem:[%s3 + $0xf0] sm:$0xff]
  %v1279 = vld [vmem:[%s3 + $0xf8] sm:$0xff]
  %v1280 = vld [vmem:[%s3 + $0x100] sm:$0xff]
  %v1281 = vld [vmem:[%s3 + $0x108] sm:$0xff]
  %v1282 = vld [vmem:[%s3 + $0x110] sm:$0xff]
  %v1283 = vld [vmem:[%s3 + $0x118] sm:$0xff]
  %v1284 = vld [vmem:[%s3 + $0x120] sm:$0xff]
  %v1285 = vld [vmem:[%s3 + $0x128] sm:$0xff]
  %v1286 = vld [vmem:[%s3 + $0x130] sm:$0xff]
  %v1287 = vld [vmem:[%s3 + $0x138] sm:$0xff]
  %v1288 = vld [vmem:[%s3 + $0x140] sm:$0xff]
  %v1289 = vld [vmem:[%s3 + $0x148] sm:$0xff]
  %v1290 = vld [vmem:[%s3 + $0x150] sm:$0xff]
  %v1291 = vld [vmem:[%s3 + $0x158] sm:$0xff]
  %v1292 = vld [vmem:[%s3 + $0x160] sm:$0xff]
  %v1293 = vld [vmem:[%s3 + $0x168] sm:$0xff]
  %v1294 = vld [vmem:[%s3 + $0x170] sm:$0xff]
  %v1295 = vld [vmem:[%s3 + $0x178] sm:$0xff]
  %v1296 = vld [vmem:[%s3 + $0x180] sm:$0xff]
  %v1297 = vld [vmem:[%s3 + $0x188] sm:$0xff]
  %v1298 = vld [vmem:[%s3 + $0x190] sm:$0xff]
  %v1299 = vld [vmem:[%s3 + $0x198] sm:$0xff]
  %v1300 = vld [vmem:[%s3 + $0x1a0] sm:$0xff]
  %v1301 = vld [vmem:[%s3 + $0x1a8] sm:$0xff]
  %v1302 = vld [vmem:[%s3 + $0x1b0] sm:$0xff]
  %v1303 = vld [vmem:[%s3 + $0x1b8] sm:$0xff]
  %v1305 = vsel %vm338, %v1245, 0
  %v1308 = vsel %vm338, %v1247, 0
  %1310 = vmatprep.subr.mxu0 %v1279
  %1311 = vmatpush1.msra.mxu0 %v1278
  %1312 = vmatprep.subr.mxu0 %v1277
  %1313 = vmatpush1.msra.mxu0 %v1276
  %1314 = vmatprep.subr.mxu0 %v1275
  %1315 = vmatpush1.msra.mxu0 %v1274
  %1316 = vmatprep.subr.mxu0 %v1273
  %1317 = vmatpush1.msra.mxu0 %v1272
  %1318 = vmatprep.subr.mxu0 %v1271
  %1319 = vmatpush1.msra.mxu0 %v1270
  %1320 = vmatprep.subr.mxu0 %v1269
  %1321 = vmatpush1.msra.mxu0 %v1268
  %1322 = vmatprep.subr.mxu0 %v1267
  %1323 = vmatpush1.msra.mxu0 %v1266
  %1324 = vmatprep.subr.mxu0 %v1265
  %1325 = vmatpush1.msra.mxu0 %v1264
  %1326 = vmatprep.subr.mxu0 %v1263
  %1327 = vmatpush1.msra.mxu0 %v1262
  %1328 = vmatprep.subr.mxu0 %v1261
  %1329 = vmatpush1.msra.mxu0 %v1260
  %1330 = vmatprep.subr.mxu0 %v1259
  %1331 = vmatpush1.msra.mxu0 %v1258
  %1332 = vmatprep.subr.mxu0 %v1257
  %1333 = vmatpush1.msra.mxu0 %v1256
  %1334 = vmatprep.subr.mxu0 %v1255
  %1335 = vmatpush1.msra.mxu0 %v1254
  %1336 = vmatprep.subr.mxu0 %v1253
  %1337 = vmatpush1.msra.mxu0 %v1252
  %1338 = vmatprep.subr.mxu0 %v1251
  %1339 = vmatpush1.msra.mxu0 %v1250
  %1340 = vmatprep.subr.mxu0 %v1249
  %1341 = vmatpush1.msra.mxu0 %v1248
  %1342 = vmatprep.subr.mxu0 0.0
  %1343 = vmatpush2.msra.mxu0 0.0
  %1344 = vmatprep.subr.mxu0 0.0
  %1345 = vmatpush2.msra.mxu0 0.0
  %1346 = vmatprep.subr.mxu0 0.0
  %1347 = vmatpush2.msra.mxu0 0.0
  %1348 = vmatprep.subr.mxu0 0.0
  %1349 = vmatpush2.msra.mxu0 0.0
  %1350 = vmatprep.subr.mxu0 %v1303
  %1351 = vmatpush2.msra.mxu0 %v1302
  %1352 = vmatprep.subr.mxu0 %v1301
  %1353 = vmatpush2.msra.mxu0 %v1300
  %1354 = vmatprep.subr.mxu0 %v1299
  %1355 = vmatpush2.msra.mxu0 %v1298
  %1356 = vmatprep.subr.mxu0 %v1297
  %1357 = vmatpush2.msra.mxu0 %v1296
  %1358 = vmatprep.subr.mxu0 %v1295
  %1359 = vmatpush2.msra.mxu0 %v1294
  %1360 = vmatprep.subr.mxu0 %v1293
  %1361 = vmatpush2.msra.mxu0 %v1292
  %1362 = vmatprep.subr.mxu0 %v1291
  %1363 = vmatpush2.msra.mxu0 %v1290
  %1364 = vmatprep.subr.mxu0 %v1289
  %1365 = vmatpush2.msra.mxu0 %v1288
  %1366 = vmatprep.subr.mxu0 %v1287
  %1367 = vmatpush2.msra.mxu0 %v1286
  %1368 = vmatprep.subr.mxu0 %v1285
  %1369 = vmatpush2.msra.mxu0 %v1284
  %1370 = vmatprep.subr.mxu0 %v1283
  %1371 = vmatpush2.msra.mxu0 %v1282
  %1372 = vmatprep.subr.mxu0 %v1281
  %1373 = vmatpush2.msra.mxu0 %v1280
  %1374 = vmatprep.mubr.f32.mxu0 %v1305
  %1375 = vmatmul.mubr.f32.gmra.mxu0 %v1244
  %v1376 = vpop.f32.mrf.mxu0
  %v1377 = vadd.f32 0.0, %v1376
  %v1378 = vpop.f32.mrf.mxu0
  %v1379 = vadd.f32 0.0, %v1378
  %1380 = vmatprep.mubr.f32.mxu0 %v1308
  %1381 = vmatmul.mubr.f32.gmra.mxu0 %v1246
  %v1382 = vpop.f32.mrf.mxu0
  %v1383 = vadd.f32 0.0, %v1382
  %v1384 = vpop.f32.mrf.mxu0
  %v1385 = vadd.f32 0.0, %v1384
  %1386 = vdwg.mxu0
  %v1391 = vrot.slane %v1377, 7
  %v1392 = vrot.slane %v1379, 7
  %v1393 = vrot.slane %v1383, 7
  %v1394 = vsel %vm370, %v1391, %v1393
  %v1395 = vrot.slane %v1385, 7
  %v1396 = vsel %vm370, %v1392, %v1395
  %v1401 = vrot.slane %v1383, 6
  %v1402 = vrot.slane %v1385, 6
  %v1405 = vsel %vm370, %v1377, %v1391
  %v1406 = vsel %vm370, %v1379, %v1392
  %v1407 = vsel %vm51, %v1394, %v1401
  %v1408 = vsel %vm51, %v1396, %v1402
  %1409 = vst [vmem:[%s14] sm:$0xff] %v1405
  %1410 = vst [vmem:[%s14 + $0x8] sm:$0xff] %v1406
  %1411 = vst [vmem:[%s14 + $0x10] sm:$0xff] %v1407
  %1412 = vst [vmem:[%s14 + $0x18] sm:$0xff] %v1408
  %v1415 = vrot.slane %v1405, 1
  %v1416 = vrot.slane %v1406, 1
  %v1419 = vmax.f32 %v1405, %v1415
  %v1420 = vmax.f32 %v1406, %v1416
  %v1423 = vrot.slane %v1407, 1
  %v1424 = vrot.slane %v1408, 1
  %v1427 = vmax.f32 %v1407, %v1423
  %v1428 = vmax.f32 %v1408, %v1424
  %v1431 = vrot.slane %v1419, 1
  %v1432 = vrot.slane %v1420, 1
  %v1435 = vrot.slane %v1419, 2
  %v1436 = vrot.slane %v1420, 2
  %v1439 = vrot.slane %v1419, 3
  %v1440 = vrot.slane %v1420, 3
  %v1445 = vrot.slane %v1427, 4
  %v1446 = vrot.slane %v1428, 4
  %v1449 = vrot.slane %v1427, 5
  %v1450 = vrot.slane %v1428, 5
  %v1453 = vrot.slane %v1427, 6
  %v1454 = vrot.slane %v1428, 6
  %v1457 = vrot.slane %v1427, 7
  %v1458 = vrot.slane %v1428, 7
  %v1461 = vsel %vm370, %v1419, %v1431
  %v1462 = vsel %vm370, %v1420, %v1432
  %vm1463 = vcmask 1041408
  %v1464 = vsel %vm1463, %v1461, %v1435
  %v1465 = vsel %vm1463, %v1462, %v1436
  %vm1466 = vcmask 1042432
  %v1467 = vsel %vm1466, %v1464, %v1439
  %v1468 = vsel %vm1466, %v1465, %v1440
  %vm1469 = vcmask 1043456
  %v1470 = vsel %vm1469, %v1467, %v1445
  %v1471 = vsel %vm1469, %v1468, %v1446
  %vm1472 = vcmask 1044480
  %v1473 = vsel %vm1472, %v1470, %v1449
  %v1474 = vsel %vm1472, %v1471, %v1450
  %v1475 = vsel %vm57, %v1473, %v1453
  %v1476 = vsel %vm57, %v1474, %v1454
  %v1477 = vsel %vm51, %v1475, %v1457
  %v1478 = vsel %vm51, %v1476, %v1458
  %v1479 = vld [vmem:[%s4] sm:$0xff]
  %v1480 = vld [vmem:[%s4 + $0x8] sm:$0xff]
  %v1481 = vld [vmem:[%s4 + $0x10] sm:$0xff]
  %v1482 = vld [vmem:[%s4 + $0x18] sm:$0xff]
  %v1483 = vld [vmem:[%s4 + $0x20] sm:$0xff]
  %v1484 = vld [vmem:[%s4 + $0x28] sm:$0xff]
  %v1485 = vld [vmem:[%s4 + $0x30] sm:$0xff]
  %v1486 = vld [vmem:[%s4 + $0x38] sm:$0xff]
  %v1487 = vld [vmem:[%s4 + $0x40] sm:$0xff]
  %v1488 = vld [vmem:[%s4 + $0x48] sm:$0xff]
  %v1489 = vld [vmem:[%s4 + $0x50] sm:$0xff]
  %v1490 = vld [vmem:[%s4 + $0x58] sm:$0xff]
  %v1491 = vld [vmem:[%s4 + $0x60] sm:$0xff]
  %v1492 = vld [vmem:[%s4 + $0x68] sm:$0xff]
  %v1493 = vld [vmem:[%s4 + $0x70] sm:$0xff]
  %v1494 = vld [vmem:[%s4 + $0x78] sm:$0xff]
  %v1495 = vld [vmem:[%s4 + $0x80] sm:$0xff]
  %v1496 = vld [vmem:[%s4 + $0x88] sm:$0xff]
  %v1497 = vld [vmem:[%s4 + $0x90] sm:$0xff]
  %v1498 = vld [vmem:[%s4 + $0x98] sm:$0xff]
  %v1499 = vld [vmem:[%s4 + $0xa0] sm:$0xff]
  %v1500 = vld [vmem:[%s4 + $0xa8] sm:$0xff]
  %v1501 = vld [vmem:[%s4 + $0xb0] sm:$0xff]
  %v1502 = vld [vmem:[%s4 + $0xb8] sm:$0xff]
  %v1503 = vld [vmem:[%s4 + $0xc0] sm:$0xff]
  %v1504 = vld [vmem:[%s4 + $0xc8] sm:$0xff]
  %v1505 = vld [vmem:[%s4 + $0xd0] sm:$0xff]
  %v1506 = vld [vmem:[%s4 + $0xd8] sm:$0xff]
  %v1507 = vld [vmem:[%s4 + $0xe0] sm:$0xff]
  %v1508 = vld [vmem:[%s4 + $0xe8] sm:$0xff]
  %v1509 = vld [vmem:[%s4 + $0xf0] sm:$0xff]
  %v1510 = vld [vmem:[%s4 + $0xf8] sm:$0xff]
  %1511 = vmatprep.subr.mxu0 0.0
  %1512 = vmatpush1.msra.mxu0 %v1494
  %1513 = vmatprep.subr.mxu0 0.0
  %1514 = vmatpush1.msra.mxu0 %v1493
  %1515 = vmatprep.subr.mxu0 0.0
  %1516 = vmatpush1.msra.mxu0 %v1492
  %1517 = vmatprep.subr.mxu0 0.0
  %1518 = vmatpush1.msra.mxu0 %v1491
  %1519 = vmatprep.subr.mxu0 0.0
  %1520 = vmatpush1.msra.mxu0 %v1490
  %1521 = vmatprep.subr.mxu0 0.0
  %1522 = vmatpush1.msra.mxu0 %v1489
  %1523 = vmatprep.subr.mxu0 0.0
  %1524 = vmatpush1.msra.mxu0 %v1488
  %1525 = vmatprep.subr.mxu0 0.0
  %1526 = vmatpush1.msra.mxu0 %v1487
  %1527 = vmatprep.subr.mxu0 0.0
  %1528 = vmatpush1.msra.mxu0 %v1486
  %1529 = vmatprep.subr.mxu0 0.0
  %1530 = vmatpush1.msra.mxu0 %v1485
  %1531 = vmatprep.subr.mxu0 0.0
  %1532 = vmatpush1.msra.mxu0 %v1484
  %1533 = vmatprep.subr.mxu0 0.0
  %1534 = vmatpush1.msra.mxu0 %v1483
  %1535 = vmatprep.subr.mxu0 0.0
  %1536 = vmatpush1.msra.mxu0 %v1482
  %1537 = vmatprep.subr.mxu0 0.0
  %1538 = vmatpush1.msra.mxu0 %v1481
  %1539 = vmatprep.subr.mxu0 0.0
  %1540 = vmatpush1.msra.mxu0 %v1480
  %1541 = vmatprep.subr.mxu0 0.0
  %1542 = vmatpush1.msra.mxu0 %v1479
  %1543 = vmatprep.subr.mxu0 0.0
  %1544 = vmatpush2.msra.mxu0 %v1510
  %1545 = vmatprep.subr.mxu0 0.0
  %1546 = vmatpush2.msra.mxu0 %v1509
  %1547 = vmatprep.subr.mxu0 0.0
  %1548 = vmatpush2.msra.mxu0 %v1508
  %1549 = vmatprep.subr.mxu0 0.0
  %1550 = vmatpush2.msra.mxu0 %v1507
  %1551 = vmatprep.subr.mxu0 0.0
  %1552 = vmatpush2.msra.mxu0 %v1506
  %1553 = vmatprep.subr.mxu0 0.0
  %1554 = vmatpush2.msra.mxu0 %v1505
  %1555 = vmatprep.subr.mxu0 0.0
  %1556 = vmatpush2.msra.mxu0 %v1504
  %1557 = vmatprep.subr.mxu0 0.0
  %1558 = vmatpush2.msra.mxu0 %v1503
  %1559 = vmatprep.subr.mxu0 0.0
  %1560 = vmatpush2.msra.mxu0 %v1502
  %1561 = vmatprep.subr.mxu0 0.0
  %1562 = vmatpush2.msra.mxu0 %v1501
  %1563 = vmatprep.subr.mxu0 0.0
  %1564 = vmatpush2.msra.mxu0 %v1500
  %1565 = vmatprep.subr.mxu0 0.0
  %1566 = vmatpush2.msra.mxu0 %v1499
  %1567 = vmatprep.subr.mxu0 0.0
  %1568 = vmatpush2.msra.mxu0 %v1498
  %1569 = vmatprep.subr.mxu0 0.0
  %1570 = vmatpush2.msra.mxu0 %v1497
  %1571 = vmatprep.subr.mxu0 0.0
  %1572 = vmatpush2.msra.mxu0 %v1496
  %1573 = vmatprep.subr.mxu0 0.0
  %1574 = vmatpush2.msra.mxu0 %v1495
  %1575 = vmatprep.mubr.f32.mxu0 %v1478
  %1576 = vmatmul.mubr.f32.gmra.mxu0 %v1477
  %v1577 = vpop.f32.mrf.mxu0
  %v1578 = vadd.f32 0.0, %v1577
  %v1579 = vpop.f32.mrf.mxu0
  %1580 = vdwg.mxu0
  %v1581 = vld [vmem:[%s5] sm:$0xff]
  %v1582 = vld [vmem:[%s5 + $0x8] sm:$0xff]
  %v1583 = vld [vmem:[%s5 + $0x10] sm:$0xff]
  %v1584 = vld [vmem:[%s5 + $0x18] sm:$0xff]
  %v1585 = vld [vmem:[%s5 + $0x20] sm:$0xff]
  %v1586 = vld [vmem:[%s5 + $0x28] sm:$0xff]
  %v1587 = vld [vmem:[%s5 + $0x30] sm:$0xff]
  %v1588 = vld [vmem:[%s5 + $0x38] sm:$0xff]
  %v1589 = vld [vmem:[%s5 + $0x40] sm:$0xff]
  %v1590 = vld [vmem:[%s5 + $0x48] sm:$0xff]
  %v1591 = vld [vmem:[%s5 + $0x50] sm:$0xff]
  %v1592 = vld [vmem:[%s5 + $0x58] sm:$0xff]
  %v1593 = vld [vmem:[%s5 + $0x60] sm:$0xff]
  %v1594 = vld [vmem:[%s5 + $0x68] sm:$0xff]
  %v1595 = vld [vmem:[%s5 + $0x70] sm:$0xff]
  %v1596 = vld [vmem:[%s5 + $0x78] sm:$0xff]
  %v1597 = vld [vmem:[%s5 + $0x80] sm:$0xff]
  %v1598 = vld [vmem:[%s5 + $0x88] sm:$0xff]
  %v1599 = vld [vmem:[%s5 + $0x90] sm:$0xff]
  %v1600 = vld [vmem:[%s5 + $0x98] sm:$0xff]
  %v1601 = vld [vmem:[%s5 + $0xa0] sm:$0xff]
  %v1602 = vld [vmem:[%s5 + $0xa8] sm:$0xff]
  %v1603 = vld [vmem:[%s5 + $0xb0] sm:$0xff]
  %v1604 = vld [vmem:[%s5 + $0xb8] sm:$0xff]
  %v1605 = vld [vmem:[%s5 + $0xc0] sm:$0xff]
  %v1606 = vld [vmem:[%s5 + $0xc8] sm:$0xff]
  %v1607 = vld [vmem:[%s5 + $0xd0] sm:$0xff]
  %v1608 = vld [vmem:[%s5 + $0xd8] sm:$0xff]
  %v1609 = vld [vmem:[%s5 + $0xe0] sm:$0xff]
  %v1610 = vld [vmem:[%s5 + $0xe8] sm:$0xff]
  %v1611 = vld [vmem:[%s5 + $0xf0] sm:$0xff]
  %v1612 = vld [vmem:[%s5 + $0xf8] sm:$0xff]
  %1613 = vmatprep.subr.mxu0 0.0
  %1614 = vmatpush1.msra.mxu0 %v1596
  %1615 = vmatprep.subr.mxu0 0.0
  %1616 = vmatpush1.msra.mxu0 %v1595
  %1617 = vmatprep.subr.mxu0 0.0
  %1618 = vmatpush1.msra.mxu0 %v1594
  %1619 = vmatprep.subr.mxu0 0.0
  %1620 = vmatpush1.msra.mxu0 %v1593
  %1621 = vmatprep.subr.mxu0 0.0
  %1622 = vmatpush1.msra.mxu0 %v1592
  %1623 = vmatprep.subr.mxu0 0.0
  %1624 = vmatpush1.msra.mxu0 %v1591
  %1625 = vmatprep.subr.mxu0 0.0
  %1626 = vmatpush1.msra.mxu0 %v1590
  %1627 = vmatprep.subr.mxu0 0.0
  %1628 = vmatpush1.msra.mxu0 %v1589
  %1629 = vmatprep.subr.mxu0 0.0
  %1630 = vmatpush1.msra.mxu0 %v1588
  %1631 = vmatprep.subr.mxu0 0.0
  %1632 = vmatpush1.msra.mxu0 %v1587
  %1633 = vmatprep.subr.mxu0 0.0
  %1634 = vmatpush1.msra.mxu0 %v1586
  %1635 = vmatprep.subr.mxu0 0.0
  %1636 = vmatpush1.msra.mxu0 %v1585
  %1637 = vmatprep.subr.mxu0 0.0
  %1638 = vmatpush1.msra.mxu0 %v1584
  %1639 = vmatprep.subr.mxu0 0.0
  %1640 = vmatpush1.msra.mxu0 %v1583
  %1641 = vmatprep.subr.mxu0 0.0
  %1642 = vmatpush1.msra.mxu0 %v1582
  %1643 = vmatprep.subr.mxu0 0.0
  %1644 = vmatpush1.msra.mxu0 %v1581
  %1645 = vmatprep.subr.mxu0 0.0
  %1646 = vmatpush2.msra.mxu0 %v1612
  %1647 = vmatprep.subr.mxu0 0.0
  %1648 = vmatpush2.msra.mxu0 %v1611
  %1649 = vmatprep.subr.mxu0 0.0
  %1650 = vmatpush2.msra.mxu0 %v1610
  %1651 = vmatprep.subr.mxu0 0.0
  %1652 = vmatpush2.msra.mxu0 %v1609
  %1653 = vmatprep.subr.mxu0 0.0
  %1654 = vmatpush2.msra.mxu0 %v1608
  %1655 = vmatprep.subr.mxu0 0.0
  %1656 = vmatpush2.msra.mxu0 %v1607
  %1657 = vmatprep.subr.mxu0 0.0
  %1658 = vmatpush2.msra.mxu0 %v1606
  %1659 = vmatprep.subr.mxu0 0.0
  %1660 = vmatpush2.msra.mxu0 %v1605
  %1661 = vmatprep.subr.mxu0 0.0
  %1662 = vmatpush2.msra.mxu0 %v1604
  %1663 = vmatprep.subr.mxu0 0.0
  %1664 = vmatpush2.msra.mxu0 %v1603
  %1665 = vmatprep.subr.mxu0 0.0
  %1666 = vmatpush2.msra.mxu0 %v1602
  %1667 = vmatprep.subr.mxu0 0.0
  %1668 = vmatpush2.msra.mxu0 %v1601
  %1669 = vmatprep.subr.mxu0 0.0
  %1670 = vmatpush2.msra.mxu0 %v1600
  %1671 = vmatprep.subr.mxu0 0.0
  %1672 = vmatpush2.msra.mxu0 %v1599
  %1673 = vmatprep.subr.mxu0 0.0
  %1674 = vmatpush2.msra.mxu0 %v1598
  %1675 = vmatprep.subr.mxu0 0.0
  %1676 = vmatpush2.msra.mxu0 %v1597
  %1677 = vmatprep.mubr.f32.mxu0 %v1478
  %1678 = vmatmul.mubr.f32.gmra.mxu0 %v1477
  %v1679 = vpop.f32.mrf.mxu0
  %v1680 = vadd.f32 0.0, %v1679
  %v1681 = vpop.f32.mrf.mxu0
  %1682 = vdwg.mxu0
  %v1683 = vmax.f32 %v1578, %v1680
  %1684 = vst [vmem:[%s13] sm:$0xff] %v1683
  // Predicated region
  $region54: #{wnet_down_conv_block.1} parent=0 // pred_check
    _
  $region55: #{wnet_down_conv_block.1} parent=0 // pred_check_branch
    %1686 = sbr.rel (0) target = $region57
  $region56: #{wnet_down_conv_block.1} parent=0 // pred_region
    _
  $region57: #{wnet_down_conv_block.1} parent=0 // pred_fallthru
    _
  // Predicated region
  $region58: #{wnet_down_conv_block.1} parent=0 // pred_check
    _
  $region59: #{wnet_down_conv_block.1} parent=0 // pred_check_branch
    %1688 = sbr.rel (0) target = $region61
  $region60: #{wnet_down_conv_block.1} parent=0 // pred_region
    _
  $region61: #{wnet_down_conv_block.1} parent=0 // pred_fallthru
    _
  // Predicated region
  $region62: #{wnet_down_conv_block.1} parent=0 // pred_check
    _
  $region63: #{wnet_down_conv_block.1} parent=0 // pred_check_branch
    %1690 = sbr.rel (0) target = $region65
  $region64: #{wnet_down_conv_block.1} parent=0 // pred_region
    _
  $region65: #{wnet_down_conv_block.1} parent=0 // pred_fallthru
    _
  // Predicated region
  $region66: #{wnet_down_conv_block.1} parent=0 // pred_check
    _
  $region67: #{wnet_down_conv_block.1} parent=0 // pred_check_branch
    %1692 = sbr.rel (0) target = $region69
  $region68: #{wnet_down_conv_block.1} parent=0 // pred_region
    _
  $region69: #{wnet_down_conv_block.1} parent=0 // pred_fallthru
    _

</llo_original>
